<compile_context>
chip_gen: v7x
topology: tpu7x:2x2x1
jax: 0.10.0
libtpu: 0.0.40
codegen_flags: <defaults>
</compile_context>

<pallas_src>
import functools

import jax
import jax.numpy as jnp
from jax import lax
from jax.experimental import pallas as pl
from jax.experimental.pallas import tpu as pltpu


def _layer_norm2d(v, w, b, eps=1e-5):
    # v: [N, C] f32, w/b: [1, C] f32  (PyTorch LayerNorm default eps=1e-5)
    mu = jnp.mean(v, axis=-1, keepdims=True)
    var = jnp.mean((v - mu) ** 2, axis=-1, keepdims=True)
    return (v - mu) * lax.rsqrt(var + eps) * w + b


def decoder_stack_kernel(x_ref, wqkv_ref, wproj_ref, w1_ref, w2_ref,
                         vecs_ref, b1_ref, wout_ref, bout_ref,
                         logits_ref, attn_ref, x_sc,
                         *, num_heads, head_size):
    l = pl.program_id(0)
    n_layers = pl.num_programs(0)
    Bb, T, C = x_ref.shape
    H, hs = num_heads, head_size

    # --- layer 0: load the embedded input into the persistent VMEM activation ---
    @pl.when(l == 0)
    def _():
        x_sc[...] = x_ref[...].reshape(Bb * T, C)

    # packed small per-layer vectors: rows 0..5 = ln1w, ln1b, ln2w, ln2b, bproj, b2
    ln1w = vecs_ref[0, 0:1]
    ln1b = vecs_ref[0, 1:2]
    ln2w = vecs_ref[0, 2:3]
    ln2b = vecs_ref[0, 3:4]
    bproj = vecs_ref[0, 4:5]
    b2 = vecs_ref[0, 5:6]

    # --- pre-norm 1 (reference overwrites x with norm1(x) before residual) ---
    xf = x_sc[...]                                           # [Bb*T, C] f32
    x1 = _layer_norm2d(xf, ln1w, ln1b)                       # [Bb*T, C] f32

    # --- fused QKV projection: one full-width bf16 matmul, f32 accumulation ---
    qkv = jnp.dot(x1.astype(jnp.bfloat16), wqkv_ref[0],
                  preferred_element_type=jnp.float32)        # [Bb*T, 3C]
    qkv3 = qkv.reshape(Bb, T, 3 * C)

    # --- causal multi-head self-attention (mask=True in the reference) ---
    scale = float(hs) ** -0.5
    row = lax.broadcasted_iota(jnp.int32, (T, T), 0)
    col = lax.broadcasted_iota(jnp.int32, (T, T), 1)
    causal = (col <= row)[None, :, :]                        # [1, T, T]

    head_outs = []
    for h in range(H):                                       # small static loop; matmuls batched over B
        qh = qkv3[:, :, h * hs:(h + 1) * hs].astype(jnp.bfloat16)             # [Bb, T, hs]
        kh = qkv3[:, :, C + h * hs:C + (h + 1) * hs].astype(jnp.bfloat16)     # [Bb, T, hs]
        vh = qkv3[:, :, 2 * C + h * hs:2 * C + (h + 1) * hs].astype(jnp.bfloat16)

        s = jnp.einsum('bqd,bkd->bqk', qh, kh,
                       preferred_element_type=jnp.float32) * scale            # [Bb, T, T]
        s = jnp.where(causal, s, -jnp.inf)                   # tril mask (future -> -inf)
        m = jnp.max(s, axis=-1, keepdims=True)
        e = jnp.exp(s - m)
        denom = jnp.sum(e, axis=-1, keepdims=True)
        wei = e * pl.reciprocal(denom, approx=True)          # softmax, divide on EUP
        attn_ref[0, h] = wei.astype(attn_ref.dtype)          # [Bb, T, T]

        oh = jnp.einsum('bqk,bkd->bqd', wei.astype(jnp.bfloat16), vh,
                        preferred_element_type=jnp.float32)  # [Bb, T, hs]
        head_outs.append(oh)

    # concat(heads) -> single full-width output projection matmul
    concat = jnp.concatenate(head_outs, axis=-1).reshape(Bb * T, C)           # [Bb*T, C]
    attn_out = jnp.dot(concat.astype(jnp.bfloat16), wproj_ref[0],
                       preferred_element_type=jnp.float32) + bproj            # [Bb*T, C]

    # --- residual + pre-norm 2 + feed-forward + residual ---
    x2 = x1 + attn_out
    x2n = _layer_norm2d(x2, ln2w, ln2b)

    h1 = jnp.maximum(jnp.dot(x2n.astype(jnp.bfloat16), w1_ref[0],
                             preferred_element_type=jnp.float32) + b1_ref[0], 0.0)
    ff = jnp.dot(h1.astype(jnp.bfloat16), w2_ref[0],
                 preferred_element_type=jnp.float32) + b2

    x_new = x2n + ff
    x_sc[...] = x_new                                        # carry to next layer (VMEM-resident)

    # --- last layer: fused final output projection Linear(n_embd, output_dim) ---
    @pl.when(l == n_layers - 1)
    def _():
        V = logits_ref.shape[-1]
        y = jnp.dot(x_new.astype(jnp.bfloat16), wout_ref[...],
                    preferred_element_type=jnp.float32) + bout_ref[...]
        logits_ref[...] = y.reshape(Bb, T, V).astype(logits_ref.dtype)


def _vmem_limit(block_bytes):
    # explicit scoped-VMEM budget sized from the resident block set (with headroom)
    return int(min(100 * 2**20, max(16 * 2**20, 8 * block_bytes)))


def make_decoder_call(L, B, T, C, H, dff, V):
    hs = C // H
    kernel = functools.partial(decoder_stack_kernel, num_heads=H, head_size=hs)

    in_specs = [
        pl.BlockSpec((B, T, C), lambda l: (0, 0, 0)),        # embedded input x (f32, read at l==0)
        pl.BlockSpec((1, C, 3 * C), lambda l: (l, 0, 0)),    # Wqkv[l] fused   (bf16)
        pl.BlockSpec((1, C, C), lambda l: (l, 0, 0)),        # Wproj[l]        (bf16)
        pl.BlockSpec((1, C, dff), lambda l: (l, 0, 0)),      # W1[l]           (bf16)
        pl.BlockSpec((1, dff, C), lambda l: (l, 0, 0)),      # W2[l]           (bf16)
        pl.BlockSpec((1, 8, C), lambda l: (l, 0, 0)),        # packed ln/bias vectors[l] (f32)
        pl.BlockSpec((1, 1, dff), lambda l: (l, 0, 0)),      # b1[l]           (f32)
        pl.BlockSpec((C, V), lambda l: (0, 0)),              # Wout            (bf16)
        pl.BlockSpec((1, V), lambda l: (0, 0)),              # bout            (f32)
    ]
    out_specs = [
        pl.BlockSpec((B, T, V), lambda l: (0, 0, 0)),                 # logits (resident, written at last layer)
        pl.BlockSpec((1, H, B, T, T), lambda l: (l, 0, 0, 0, 0)),     # per-layer attention maps
    ]

    block_bytes = (B * T * C * 4
                   + C * 3 * C * 2 + C * C * 2 + C * dff * 2 + dff * C * 2
                   + 8 * C * 4 + dff * 4
                   + C * V * 2 + V * 4
                   + B * T * V * 4
                   + H * B * T * T * 4
                   + B * T * C * 4)          # scratch carry

    return pl.pallas_call(
        kernel,
        grid_spec=pltpu.PrefetchScalarGridSpec(
            num_scalar_prefetch=0,
            grid=(L,),
            in_specs=in_specs,
            out_specs=out_specs,
            scratch_shapes=[pltpu.VMEM((B * T, C), jnp.float32)],
        ),
        out_shape=(jax.ShapeDtypeStruct((B, T, V), jnp.float32),
                   jax.ShapeDtypeStruct((L, H, B, T, T), jnp.float32)),
        compiler_params=pltpu.CompilerParams(
            dimension_semantics=("arbitrary",),            # layers are sequentially dependent
            vmem_limit_bytes=_vmem_limit(block_bytes)),
    )


def init_params(key, vocab, max_seq_len, C, H, dff, num_layers):
    keys = jax.random.split(key, 3 + num_layers)

    def unif(k_, shape, fan_in, dtype=jnp.float32):
        bound = 1.0 / (fan_in ** 0.5)
        return jax.random.uniform(k_, shape, jnp.float32, -bound, bound).astype(dtype)

    ko = jax.random.split(keys[2], 2)
    params = {
        "tok_emb": jax.random.normal(keys[0], (vocab, C), jnp.float32) * 0.02,
        "pos_emb": jax.random.normal(keys[1], (max_seq_len, C), jnp.float32) * 0.02,
        "wout": unif(ko[0], (C, vocab), C, jnp.bfloat16),     # output_proj weight [in, out]
        "bout": unif(ko[1], (1, vocab), C),                   # output_proj bias
    }

    wqkv_l, wproj_l, w1_l, w2_l, b1_l, vecs_l = [], [], [], [], [], []
    for l in range(num_layers):
        k = jax.random.split(keys[3 + l], 9)
        wq = unif(k[0], (C, C), C)      # columns: head-major blocks of size hs
        wk = unif(k[1], (C, C), C)
        wv = unif(k[2], (C, C), C)
        wqkv_l.append(jnp.concatenate([wq, wk, wv], axis=1).astype(jnp.bfloat16))  # [C, 3C]

        vecs = jnp.zeros((8, C), jnp.float32)
        vecs = vecs.at[0].set(1.0)                      # ln1 weight
        vecs = vecs.at[1].set(0.0)                      # ln1 bias
        vecs = vecs.at[2].set(1.0)                      # ln2 weight
        vecs = vecs.at[3].set(0.0)                      # ln2 bias
        vecs = vecs.at[4].set(unif(k[3], (C,), C))      # attn proj bias
        vecs = vecs.at[5].set(unif(k[4], (C,), dff))    # ffn bias 2
        vecs_l.append(vecs)

        wproj_l.append(unif(k[5], (C, C), C, jnp.bfloat16))   # stored as [in, out]
        w1_l.append(unif(k[6], (C, dff), C, jnp.bfloat16))
        b1_l.append(unif(k[7], (1, dff), C))
        w2_l.append(unif(k[8], (dff, C), dff, jnp.bfloat16))

    params["wqkv"] = jnp.stack(wqkv_l)      # [L, C, 3C]  bf16
    params["wproj"] = jnp.stack(wproj_l)    # [L, C, C]   bf16
    params["w1"] = jnp.stack(w1_l)          # [L, C, dff] bf16
    params["w2"] = jnp.stack(w2_l)          # [L, dff, C] bf16
    params["b1"] = jnp.stack(b1_l)          # [L, 1, dff] f32
    params["vecs"] = jnp.stack(vecs_l)      # [L, 8, C]   f32
    return params


def decoder_forward(params, tokens, stack_call):
    B, T = tokens.shape
    # embedding lookup is glue (HBM gather), matching token_emb(x) + pos_emb(arange(T));
    # dropout p=0.0 is the identity.
    x = (params["tok_emb"][tokens] + params["pos_emb"][:T][None, :, :]).astype(jnp.float32)
    logits, attn = stack_call(x, params["wqkv"], params["wproj"], params["w1"],
                              params["w2"], params["vecs"], params["b1"],
                              params["wout"], params["bout"])
    L, H = attn.shape[0], attn.shape[1]
    # split the [L, H, B, T, T] slab into the torch-style flat list of [B, T, T] maps
    attn_maps_list = [attn[l, h] for l in range(L) for h in range(H)]
    return logits, attn_maps_list


if __name__ == "__main__":
    # small shapes consistent with the module
    B, T = 2, 8
    C, H, dff = 32, 2, 64
    vocab, max_seq_len, num_layers = 50, 16, 2

    key = jax.random.PRNGKey(0)
    kp, kt = jax.random.split(key)
    params = init_params(kp, vocab, max_seq_len, C, H, dff, num_layers)
    tokens = jax.random.randint(kt, (B, T), 0, vocab, dtype=jnp.int32)

    stack_call = make_decoder_call(num_layers, B, T, C, H, dff, vocab)

    logits, attn_maps = decoder_forward(params, tokens, stack_call)
    logits = jax.block_until_ready(logits)
    attn_maps = [jax.block_until_ready(a) for a in attn_maps]

    assert logits.shape == (B, T, vocab)
    assert len(attn_maps) == num_layers * H
    assert all(a.shape == (B, T, T) for a in attn_maps)
    assert bool(jnp.all(jnp.isfinite(logits)))
    # causal sanity: attention to future positions must be exactly zero
    assert bool(jnp.all(attn_maps[0][:, 0, 1:] == 0.0))
    print("KERNEL_OK")
</pallas_src>

<mosaic_0001>
module attributes {stable_mosaic.version = 11 : i64} {
  func.func @decoder_stack_kernel(%arg0: i32, %arg1: memref<2x8x32xf32, #tpu.memory_space<vmem>>, %arg2: memref<1x32x96xbf16, #tpu.memory_space<vmem>>, %arg3: memref<1x32x32xbf16, #tpu.memory_space<vmem>>, %arg4: memref<1x32x64xbf16, #tpu.memory_space<vmem>>, %arg5: memref<1x64x32xbf16, #tpu.memory_space<vmem>>, %arg6: memref<1x8x32xf32, #tpu.memory_space<vmem>>, %arg7: memref<1x1x64xf32, #tpu.memory_space<vmem>>, %arg8: memref<32x50xbf16, #tpu.memory_space<vmem>>, %arg9: memref<1x50xf32, #tpu.memory_space<vmem>>, %arg10: memref<2x8x50xf32, #tpu.memory_space<vmem>>, %arg11: memref<1x2x2x8x8xf32, #tpu.memory_space<vmem>>, %arg12: memref<16x32xf32, #tpu.memory_space<vmem>>) attributes {dimension_semantics = [#tpu.dimension_semantics<arbitrary>], iteration_bounds = array<i64: 2>, scalar_prefetch = 0 : i64, scratch_operands = 1 : i64, tpu.core_type = #tpu.core_type<tc>, window_params = [{pipeline_mode = #tpu.pipeline_mode<synchronous>, transform_indices = @transform_0, window_bounds = array<i64: 2, 8, 32>}, {transform_indices = @transform_1, window_bounds = array<i64: 1, 32, 96>}, {transform_indices = @transform_2, window_bounds = array<i64: 1, 32, 32>}, {transform_indices = @transform_3, window_bounds = array<i64: 1, 32, 64>}, {transform_indices = @transform_4, window_bounds = array<i64: 1, 64, 32>}, {transform_indices = @transform_5, window_bounds = array<i64: 1, 8, 32>}, {transform_indices = @transform_6, window_bounds = array<i64: 1, 1, 64>}, {pipeline_mode = #tpu.pipeline_mode<synchronous>, transform_indices = @transform_7, window_bounds = array<i64: 32, 50>}, {pipeline_mode = #tpu.pipeline_mode<synchronous>, transform_indices = @transform_8, window_bounds = array<i64: 1, 50>}, {pipeline_mode = #tpu.pipeline_mode<synchronous>, transform_indices = @transform_9, window_bounds = array<i64: 2, 8, 50>}, {transform_indices = @transform_10, window_bounds = array<i64: 1, 2, 2, 8, 8>}]} {
    %c0_i32 = arith.constant 0 : i32
    %0 = arith.cmpi eq, %arg0, %c0_i32 : i32
    %1 = arith.extui %0 : i1 to i32
    %c0_i32_0 = arith.constant 0 : i32
    %2 = arith.cmpi ne, %1, %c0_i32_0 : i32
    scf.if %2 {
      %c0_69 = arith.constant 0 : index
      %c0_70 = arith.constant 0 : index
      %c0_71 = arith.constant 0 : index
      %155 = vector.load %arg1[%c0_69, %c0_70, %c0_71] : memref<2x8x32xf32, #tpu.memory_space<vmem>>, vector<2x8x32xf32>
      %156 = vector.shape_cast %155 : vector<2x8x32xf32> to vector<16x32xf32>
      %c0_72 = arith.constant 0 : index
      %c0_73 = arith.constant 0 : index
      %157 = vector.load %arg12[%c0_72, %c0_73] : memref<16x32xf32, #tpu.memory_space<vmem>>, vector<16x32xf32>
      tpu.vector_store %arg12[%c0_72, %c0_73], %156 {strides = array<i32>} : memref<16x32xf32, #tpu.memory_space<vmem>>, vector<16x32xf32>,
    } else {
    }
    %c0 = arith.constant 0 : index
    %c0_1 = arith.constant 0 : index
    %c0_2 = arith.constant 0 : index
    %3 = vector.load %arg6[%c0, %c0_1, %c0_2] : memref<1x8x32xf32, #tpu.memory_space<vmem>>, vector<1x1x32xf32>
    %4 = vector.shape_cast %3 : vector<1x1x32xf32> to vector<1x32xf32>
    %c0_3 = arith.constant 0 : index
    %c1 = arith.constant 1 : index
    %c0_4 = arith.constant 0 : index
    %5 = vector.load %arg6[%c0_3, %c1, %c0_4] : memref<1x8x32xf32, #tpu.memory_space<vmem>>, vector<1x1x32xf32>
    %6 = vector.shape_cast %5 : vector<1x1x32xf32> to vector<1x32xf32>
    %c0_5 = arith.constant 0 : index
    %c2 = arith.constant 2 : index
    %c0_6 = arith.constant 0 : index
    %7 = vector.load %arg6[%c0_5, %c2, %c0_6] : memref<1x8x32xf32, #tpu.memory_space<vmem>>, vector<1x1x32xf32>
    %8 = vector.shape_cast %7 : vector<1x1x32xf32> to vector<1x32xf32>
    %c0_7 = arith.constant 0 : index
    %c3 = arith.constant 3 : index
    %c0_8 = arith.constant 0 : index
    %9 = vector.load %arg6[%c0_7, %c3, %c0_8] : memref<1x8x32xf32, #tpu.memory_space<vmem>>, vector<1x1x32xf32>
    %10 = vector.shape_cast %9 : vector<1x1x32xf32> to vector<1x32xf32>
    %c0_9 = arith.constant 0 : index
    %c4 = arith.constant 4 : index
    %c0_10 = arith.constant 0 : index
    %11 = vector.load %arg6[%c0_9, %c4, %c0_10] : memref<1x8x32xf32, #tpu.memory_space<vmem>>, vector<1x1x32xf32>
    %12 = vector.shape_cast %11 : vector<1x1x32xf32> to vector<1x32xf32>
    %c0_11 = arith.constant 0 : index
    %c5 = arith.constant 5 : index
    %c0_12 = arith.constant 0 : index
    %13 = vector.load %arg6[%c0_11, %c5, %c0_12] : memref<1x8x32xf32, #tpu.memory_space<vmem>>, vector<1x1x32xf32>
    %14 = vector.shape_cast %13 : vector<1x1x32xf32> to vector<1x32xf32>
    %c0_13 = arith.constant 0 : index
    %c0_14 = arith.constant 0 : index
    %15 = vector.load %arg12[%c0_13, %c0_14] : memref<16x32xf32, #tpu.memory_space<vmem>>, vector<16x32xf32>
    %cst = arith.constant dense<0.000000e+00> : vector<16xf32>
    %16 = vector.multi_reduction <add>, %15, %cst [1] : vector<16x32xf32> to vector<16xf32>
    %17 = vector.shape_cast %16 : vector<16xf32> to vector<16x1xf32>
    %cst_15 = arith.constant 3.200000e+01 : f32
    %18 = vector.broadcast %cst_15 : f32 to vector<16x1xf32>
    %19 = arith.divf %17, %18 : vector<16x1xf32>
    %20 = vector.broadcast %19 : vector<16x1xf32> to vector<16x32xf32>
    %21 = arith.subf %15, %20 : vector<16x32xf32>
    %22 = arith.mulf %21, %21 : vector<16x32xf32>
    %cst_16 = arith.constant dense<0.000000e+00> : vector<16xf32>
    %23 = vector.multi_reduction <add>, %22, %cst_16 [1] : vector<16x32xf32> to vector<16xf32>
    %24 = vector.shape_cast %23 : vector<16xf32> to vector<16x1xf32>
    %cst_17 = arith.constant 3.200000e+01 : f32
    %25 = vector.broadcast %cst_17 : f32 to vector<16x1xf32>
    %26 = arith.divf %24, %25 : vector<16x1xf32>
    %27 = vector.broadcast %19 : vector<16x1xf32> to vector<16x32xf32>
    %28 = arith.subf %15, %27 : vector<16x32xf32>
    %cst_18 = arith.constant 9.99999974E-6 : f32
    %29 = vector.broadcast %cst_18 : f32 to vector<16x1xf32>
    %30 = arith.addf %26, %29 : vector<16x1xf32>
    %31 = math.rsqrt %30 : vector<16x1xf32>
    %32 = vector.broadcast %31 : vector<16x1xf32> to vector<16x32xf32>
    %33 = arith.mulf %28, %32 : vector<16x32xf32>
    %34 = vector.broadcast %4 : vector<1x32xf32> to vector<16x32xf32>
    %35 = arith.mulf %33, %34 : vector<16x32xf32>
    %36 = vector.broadcast %6 : vector<1x32xf32> to vector<16x32xf32>
    %37 = arith.addf %35, %36 : vector<16x32xf32>
    %38 = arith.truncf %37 : vector<16x32xf32> to vector<16x32xbf16>
    %c0_19 = arith.constant 0 : index
    %c0_20 = arith.constant 0 : index
    %c0_21 = arith.constant 0 : index
    %39 = vector.load %arg2[%c0_19, %c0_20, %c0_21] : memref<1x32x96xbf16, #tpu.memory_space<vmem>>, vector<1x32x96xbf16>
    %40 = vector.shape_cast %39 : vector<1x32x96xbf16> to vector<32x96xbf16>
    %cst_22 = arith.constant dense<0.000000e+00> : vector<16x96xf32>
    %41 = tpu.matmul %38, %40, %cst_22 {dimension_numbers = #tpu.dot_dimension_numbers<[1], [0], [0], [1], [0, 0, 1, 1], [], []>} : vector<16x32xbf16>, vector<32x96xbf16>, vector<16x96xf32> -> vector<16x96xf32>
    %42 = vector.shape_cast %41 : vector<16x96xf32> to vector<2x8x96xf32>
    %43 = tpu.iota {dimensions = array<i32: 0>} : vector<8x8xi32>
    %44 = tpu.iota {dimensions = array<i32: 1>} : vector<8x8xi32>
    %45 = arith.cmpi sle, %44, %43 : vector<8x8xi32>
    %46 = vector.shape_cast %45 : vector<8x8xi1> to vector<1x8x8xi1>
    %47 = vector.extract_strided_slice %42 {offsets = [0, 0, 0], sizes = [2, 8, 16], strides = [1, 1, 1]} : vector<2x8x96xf32> to vector<2x8x16xf32>
    %48 = arith.truncf %47 : vector<2x8x16xf32> to vector<2x8x16xbf16>
    %49 = vector.extract_strided_slice %42 {offsets = [0, 0, 32], sizes = [2, 8, 16], strides = [1, 1, 1]} : vector<2x8x96xf32> to vector<2x8x16xf32>
    %50 = arith.truncf %49 : vector<2x8x16xf32> to vector<2x8x16xbf16>
    %51 = vector.extract_strided_slice %42 {offsets = [0, 0, 64], sizes = [2, 8, 16], strides = [1, 1, 1]} : vector<2x8x96xf32> to vector<2x8x16xf32>
    %52 = arith.truncf %51 : vector<2x8x16xf32> to vector<2x8x16xbf16>
    "tpu.trace_start"() <{level = 10 : i32, message = "bqd,bkd->bqk"}> : () -> ()
    %cst_23 = arith.constant dense<0.000000e+00> : vector<2x8x8xf32>
    %53 = tpu.matmul %48, %50, %cst_23 {dimension_numbers = #tpu.dot_dimension_numbers<[2], [2], [1], [1], [0, 0, 0, 1, 1, 1], [0], [0]>} : vector<2x8x16xbf16>, vector<2x8x16xbf16>, vector<2x8x8xf32> -> vector<2x8x8xf32>
    "tpu.trace_stop"() : () -> ()
    %cst_24 = arith.constant 2.500000e-01 : f32
    %54 = vector.broadcast %cst_24 : f32 to vector<2x8x8xf32>
    %55 = arith.mulf %53, %54 : vector<2x8x8xf32>
    %cst_25 = arith.constant 0xFF800000 : f32
    %56 = vector.shape_cast %46 : vector<1x8x8xi1> to vector<1x8x8xi1>
    %57 = vector.broadcast %56 : vector<1x8x8xi1> to vector<2x8x8xi1>
    %58 = vector.broadcast %cst_25 : f32 to vector<2x8x8xf32>
    %59 = arith.select %57, %55, %58 : vector<2x8x8xi1>, vector<2x8x8xf32>
    %cst_26 = arith.constant dense<0xFF800000> : vector<2x8xf32>
    %60 = vector.multi_reduction <maximumf>, %59, %cst_26 [2] : vector<2x8x8xf32> to vector<2x8xf32>
    %61 = vector.shape_cast %60 : vector<2x8xf32> to vector<2x8x1xf32>
    %62 = vector.broadcast %61 : vector<2x8x1xf32> to vector<2x8x8xf32>
    %63 = arith.subf %59, %62 : vector<2x8x8xf32>
    %64 = math.exp %63 : vector<2x8x8xf32>
    %cst_27 = arith.constant dense<0.000000e+00> : vector<2x8xf32>
    %65 = vector.multi_reduction <add>, %64, %cst_27 [2] : vector<2x8x8xf32> to vector<2x8xf32>
    %66 = vector.shape_cast %65 : vector<2x8xf32> to vector<2x8x1xf32>
    %67 = tpu.reciprocal %66 {approx = true} : vector<2x8x1xf32> -> vector<2x8x1xf32>
    %68 = vector.broadcast %67 : vector<2x8x1xf32> to vector<2x8x8xf32>
    %69 = arith.mulf %64, %68 : vector<2x8x8xf32>
    %c0_28 = arith.constant 0 : index
    %c0_29 = arith.constant 0 : index
    %c0_30 = arith.constant 0 : index
    %c0_31 = arith.constant 0 : index
    %c0_32 = arith.constant 0 : index
    %70 = vector.load %arg11[%c0_28, %c0_29, %c0_30, %c0_31, %c0_32] : memref<1x2x2x8x8xf32, #tpu.memory_space<vmem>>, vector<1x1x2x8x8xf32>
    %71 = vector.shape_cast %70 : vector<1x1x2x8x8xf32> to vector<2x8x8xf32>
    %72 = vector.shape_cast %69 : vector<2x8x8xf32> to vector<1x1x2x8x8xf32>
    tpu.vector_store %arg11[%c0_28, %c0_29, %c0_30, %c0_31, %c0_32], %72 {strides = array<i32>} : memref<1x2x2x8x8xf32, #tpu.memory_space<vmem>>, vector<1x1x2x8x8xf32>,
    %73 = arith.truncf %69 : vector<2x8x8xf32> to vector<2x8x8xbf16>
    "tpu.trace_start"() <{level = 10 : i32, message = "bqk,bkd->bqd"}> : () -> ()
    %cst_33 = arith.constant dense<0.000000e+00> : vector<2x8x16xf32>
    %74 = tpu.matmul %73, %52, %cst_33 {dimension_numbers = #tpu.dot_dimension_numbers<[2], [1], [1], [2], [0, 0, 0, 1, 1, 2], [0], [0]>} : vector<2x8x8xbf16>, vector<2x8x16xbf16>, vector<2x8x16xf32> -> vector<2x8x16xf32>
    "tpu.trace_stop"() : () -> ()
    %75 = vector.extract_strided_slice %42 {offsets = [0, 0, 16], sizes = [2, 8, 16], strides = [1, 1, 1]} : vector<2x8x96xf32> to vector<2x8x16xf32>
    %76 = arith.truncf %75 : vector<2x8x16xf32> to vector<2x8x16xbf16>
    %77 = vector.extract_strided_slice %42 {offsets = [0, 0, 48], sizes = [2, 8, 16], strides = [1, 1, 1]} : vector<2x8x96xf32> to vector<2x8x16xf32>
    %78 = arith.truncf %77 : vector<2x8x16xf32> to vector<2x8x16xbf16>
    %79 = vector.extract_strided_slice %42 {offsets = [0, 0, 80], sizes = [2, 8, 16], strides = [1, 1, 1]} : vector<2x8x96xf32> to vector<2x8x16xf32>
    %80 = arith.truncf %79 : vector<2x8x16xf32> to vector<2x8x16xbf16>
    "tpu.trace_start"() <{level = 10 : i32, message = "bqd,bkd->bqk"}> : () -> ()
    %cst_34 = arith.constant dense<0.000000e+00> : vector<2x8x8xf32>
    %81 = tpu.matmul %76, %78, %cst_34 {dimension_numbers = #tpu.dot_dimension_numbers<[2], [2], [1], [1], [0, 0, 0, 1, 1, 1], [0], [0]>} : vector<2x8x16xbf16>, vector<2x8x16xbf16>, vector<2x8x8xf32> -> vector<2x8x8xf32>
    "tpu.trace_stop"() : () -> ()
    %cst_35 = arith.constant 2.500000e-01 : f32
    %82 = vector.broadcast %cst_35 : f32 to vector<2x8x8xf32>
    %83 = arith.mulf %81, %82 : vector<2x8x8xf32>
    %cst_36 = arith.constant 0xFF800000 : f32
    %84 = vector.shape_cast %46 : vector<1x8x8xi1> to vector<1x8x8xi1>
    %85 = vector.broadcast %84 : vector<1x8x8xi1> to vector<2x8x8xi1>
    %86 = vector.broadcast %cst_36 : f32 to vector<2x8x8xf32>
    %87 = arith.select %85, %83, %86 : vector<2x8x8xi1>, vector<2x8x8xf32>
    %cst_37 = arith.constant dense<0xFF800000> : vector<2x8xf32>
    %88 = vector.multi_reduction <maximumf>, %87, %cst_37 [2] : vector<2x8x8xf32> to vector<2x8xf32>
    %89 = vector.shape_cast %88 : vector<2x8xf32> to vector<2x8x1xf32>
    %90 = vector.broadcast %89 : vector<2x8x1xf32> to vector<2x8x8xf32>
    %91 = arith.subf %87, %90 : vector<2x8x8xf32>
    %92 = math.exp %91 : vector<2x8x8xf32>
    %cst_38 = arith.constant dense<0.000000e+00> : vector<2x8xf32>
    %93 = vector.multi_reduction <add>, %92, %cst_38 [2] : vector<2x8x8xf32> to vector<2x8xf32>
    %94 = vector.shape_cast %93 : vector<2x8xf32> to vector<2x8x1xf32>
    %95 = tpu.reciprocal %94 {approx = true} : vector<2x8x1xf32> -> vector<2x8x1xf32>
    %96 = vector.broadcast %95 : vector<2x8x1xf32> to vector<2x8x8xf32>
    %97 = arith.mulf %92, %96 : vector<2x8x8xf32>
    %c0_39 = arith.constant 0 : index
    %c1_40 = arith.constant 1 : index
    %c0_41 = arith.constant 0 : index
    %c0_42 = arith.constant 0 : index
    %c0_43 = arith.constant 0 : index
    %98 = vector.load %arg11[%c0_39, %c1_40, %c0_41, %c0_42, %c0_43] : memref<1x2x2x8x8xf32, #tpu.memory_space<vmem>>, vector<1x1x2x8x8xf32>
    %99 = vector.shape_cast %98 : vector<1x1x2x8x8xf32> to vector<2x8x8xf32>
    %100 = vector.shape_cast %97 : vector<2x8x8xf32> to vector<1x1x2x8x8xf32>
    tpu.vector_store %arg11[%c0_39, %c1_40, %c0_41, %c0_42, %c0_43], %100 {strides = array<i32>} : memref<1x2x2x8x8xf32, #tpu.memory_space<vmem>>, vector<1x1x2x8x8xf32>,
    %101 = arith.truncf %97 : vector<2x8x8xf32> to vector<2x8x8xbf16>
    "tpu.trace_start"() <{level = 10 : i32, message = "bqk,bkd->bqd"}> : () -> ()
    %cst_44 = arith.constant dense<0.000000e+00> : vector<2x8x16xf32>
    %102 = tpu.matmul %101, %80, %cst_44 {dimension_numbers = #tpu.dot_dimension_numbers<[2], [1], [1], [2], [0, 0, 0, 1, 1, 2], [0], [0]>} : vector<2x8x8xbf16>, vector<2x8x16xbf16>, vector<2x8x16xf32> -> vector<2x8x16xf32>
    "tpu.trace_stop"() : () -> ()
    %103 = tpu.concatenate %74, %102 in 2 : vector<2x8x16xf32>, vector<2x8x16xf32> -> vector<2x8x32xf32>
    %104 = vector.shape_cast %103 : vector<2x8x32xf32> to vector<16x32xf32>
    %105 = arith.truncf %104 : vector<16x32xf32> to vector<16x32xbf16>
    %c0_45 = arith.constant 0 : index
    %c0_46 = arith.constant 0 : index
    %c0_47 = arith.constant 0 : index
    %106 = vector.load %arg3[%c0_45, %c0_46, %c0_47] : memref<1x32x32xbf16, #tpu.memory_space<vmem>>, vector<1x32x32xbf16>
    %107 = vector.shape_cast %106 : vector<1x32x32xbf16> to vector<32x32xbf16>
    %cst_48 = arith.constant dense<0.000000e+00> : vector<16x32xf32>
    %108 = tpu.matmul %105, %107, %cst_48 {dimension_numbers = #tpu.dot_dimension_numbers<[1], [0], [0], [1], [0, 0, 1, 1], [], []>} : vector<16x32xbf16>, vector<32x32xbf16>, vector<16x32xf32> -> vector<16x32xf32>
    %109 = vector.broadcast %12 : vector<1x32xf32> to vector<16x32xf32>
    %110 = arith.addf %108, %109 : vector<16x32xf32>
    %111 = arith.addf %37, %110 : vector<16x32xf32>
    %cst_49 = arith.constant dense<0.000000e+00> : vector<16xf32>
    %112 = vector.multi_reduction <add>, %111, %cst_49 [1] : vector<16x32xf32> to vector<16xf32>
    %113 = vector.shape_cast %112 : vector<16xf32> to vector<16x1xf32>
    %cst_50 = arith.constant 3.200000e+01 : f32
    %114 = vector.broadcast %cst_50 : f32 to vector<16x1xf32>
    %115 = arith.divf %113, %114 : vector<16x1xf32>
    %116 = vector.broadcast %115 : vector<16x1xf32> to vector<16x32xf32>
    %117 = arith.subf %111, %116 : vector<16x32xf32>
    %118 = arith.mulf %117, %117 : vector<16x32xf32>
    %cst_51 = arith.constant dense<0.000000e+00> : vector<16xf32>
    %119 = vector.multi_reduction <add>, %118, %cst_51 [1] : vector<16x32xf32> to vector<16xf32>
    %120 = vector.shape_cast %119 : vector<16xf32> to vector<16x1xf32>
    %cst_52 = arith.constant 3.200000e+01 : f32
    %121 = vector.broadcast %cst_52 : f32 to vector<16x1xf32>
    %122 = arith.divf %120, %121 : vector<16x1xf32>
    %123 = vector.broadcast %115 : vector<16x1xf32> to vector<16x32xf32>
    %124 = arith.subf %111, %123 : vector<16x32xf32>
    %cst_53 = arith.constant 9.99999974E-6 : f32
    %125 = vector.broadcast %cst_53 : f32 to vector<16x1xf32>
    %126 = arith.addf %122, %125 : vector<16x1xf32>
    %127 = math.rsqrt %126 : vector<16x1xf32>
    %128 = vector.broadcast %127 : vector<16x1xf32> to vector<16x32xf32>
    %129 = arith.mulf %124, %128 : vector<16x32xf32>
    %130 = vector.broadcast %8 : vector<1x32xf32> to vector<16x32xf32>
    %131 = arith.mulf %129, %130 : vector<16x32xf32>
    %132 = vector.broadcast %10 : vector<1x32xf32> to vector<16x32xf32>
    %133 = arith.addf %131, %132 : vector<16x32xf32>
    %134 = arith.truncf %133 : vector<16x32xf32> to vector<16x32xbf16>
    %c0_54 = arith.constant 0 : index
    %c0_55 = arith.constant 0 : index
    %c0_56 = arith.constant 0 : index
    %135 = vector.load %arg4[%c0_54, %c0_55, %c0_56] : memref<1x32x64xbf16, #tpu.memory_space<vmem>>, vector<1x32x64xbf16>
    %136 = vector.shape_cast %135 : vector<1x32x64xbf16> to vector<32x64xbf16>
    %cst_57 = arith.constant dense<0.000000e+00> : vector<16x64xf32>
    %137 = tpu.matmul %134, %136, %cst_57 {dimension_numbers = #tpu.dot_dimension_numbers<[1], [0], [0], [1], [0, 0, 1, 1], [], []>} : vector<16x32xbf16>, vector<32x64xbf16>, vector<16x64xf32> -> vector<16x64xf32>
    %c0_58 = arith.constant 0 : index
    %c0_59 = arith.constant 0 : index
    %c0_60 = arith.constant 0 : index
    %138 = vector.load %arg7[%c0_58, %c0_59, %c0_60] : memref<1x1x64xf32, #tpu.memory_space<vmem>>, vector<1x1x64xf32>
    %139 = vector.shape_cast %138 : vector<1x1x64xf32> to vector<1x64xf32>
    %140 = vector.broadcast %139 : vector<1x64xf32> to vector<16x64xf32>
    %141 = arith.addf %137, %140 : vector<16x64xf32>
    %cst_61 = arith.constant 0.000000e+00 : f32
    %142 = vector.broadcast %cst_61 : f32 to vector<16x64xf32>
    %143 = arith.maximumf %141, %142 : vector<16x64xf32>
    %144 = arith.truncf %143 : vector<16x64xf32> to vector<16x64xbf16>
    %c0_62 = arith.constant 0 : index
    %c0_63 = arith.constant 0 : index
    %c0_64 = arith.constant 0 : index
    %145 = vector.load %arg5[%c0_62, %c0_63, %c0_64] : memref<1x64x32xbf16, #tpu.memory_space<vmem>>, vector<1x64x32xbf16>
    %146 = vector.shape_cast %145 : vector<1x64x32xbf16> to vector<64x32xbf16>
    %cst_65 = arith.constant dense<0.000000e+00> : vector<16x32xf32>
    %147 = tpu.matmul %144, %146, %cst_65 {dimension_numbers = #tpu.dot_dimension_numbers<[1], [0], [0], [1], [0, 0, 1, 1], [], []>} : vector<16x64xbf16>, vector<64x32xbf16>, vector<16x32xf32> -> vector<16x32xf32>
    %148 = vector.broadcast %14 : vector<1x32xf32> to vector<16x32xf32>
    %149 = arith.addf %147, %148 : vector<16x32xf32>
    %150 = arith.addf %133, %149 : vector<16x32xf32>
    %c0_66 = arith.constant 0 : index
    %c0_67 = arith.constant 0 : index
    %151 = vector.load %arg12[%c0_66, %c0_67] : memref<16x32xf32, #tpu.memory_space<vmem>>, vector<16x32xf32>
    tpu.vector_store %arg12[%c0_66, %c0_67], %150 {strides = array<i32>} : memref<16x32xf32, #tpu.memory_space<vmem>>, vector<16x32xf32>,
    %c1_i32 = arith.constant 1 : i32
    %152 = arith.cmpi eq, %arg0, %c1_i32 : i32
    %153 = arith.extui %152 : i1 to i32
    %c0_i32_68 = arith.constant 0 : i32
    %154 = arith.cmpi ne, %153, %c0_i32_68 : i32
    scf.if %154 {
      %155 = arith.truncf %150 : vector<16x32xf32> to vector<16x32xbf16>
      %c0_69 = arith.constant 0 : index
      %c0_70 = arith.constant 0 : index
      %156 = vector.load %arg8[%c0_69, %c0_70] : memref<32x50xbf16, #tpu.memory_space<vmem>>, vector<32x50xbf16>
      %cst_71 = arith.constant dense<0.000000e+00> : vector<16x50xf32>
      %157 = tpu.matmul %155, %156, %cst_71 {dimension_numbers = #tpu.dot_dimension_numbers<[1], [0], [0], [1], [0, 0, 1, 1], [], []>} : vector<16x32xbf16>, vector<32x50xbf16>, vector<16x50xf32> -> vector<16x50xf32>
      %c0_72 = arith.constant 0 : index
      %c0_73 = arith.constant 0 : index
      %158 = vector.load %arg9[%c0_72, %c0_73] : memref<1x50xf32, #tpu.memory_space<vmem>>, vector<1x50xf32>
      %159 = vector.broadcast %158 : vector<1x50xf32> to vector<16x50xf32>
      %160 = arith.addf %157, %159 : vector<16x50xf32>
      %161 = vector.shape_cast %160 : vector<16x50xf32> to vector<2x8x50xf32>
      %c0_74 = arith.constant 0 : index
      %c0_75 = arith.constant 0 : index
      %c0_76 = arith.constant 0 : index
      %162 = vector.load %arg10[%c0_74, %c0_75, %c0_76] : memref<2x8x50xf32, #tpu.memory_space<vmem>>, vector<2x8x50xf32>
      tpu.vector_store %arg10[%c0_74, %c0_75, %c0_76], %161 {strides = array<i32>} : memref<2x8x50xf32, #tpu.memory_space<vmem>>, vector<2x8x50xf32>,
    } else {
    }
    return
  }
  func.func @transform_0(%arg0: i32) -> (i32, i32, i32) {
    %c0_i32 = arith.constant 0 : i32
    %c0_i32_0 = arith.constant 0 : i32
    %c0_i32_1 = arith.constant 0 : i32
    %c0_i32_2 = arith.constant 0 : i32
    return %c0_i32, %c0_i32_0, %c0_i32_1 : i32, i32, i32
  }
  func.func @transform_1(%arg0: i32) -> (i32, i32, i32) {
    %c0_i32 = arith.constant 0 : i32
    %c0_i32_0 = arith.constant 0 : i32
    %c0_i32_1 = arith.constant 0 : i32
    return %arg0, %c0_i32, %c0_i32_0 : i32, i32, i32
  }
  func.func @transform_2(%arg0: i32) -> (i32, i32, i32) {
    %c0_i32 = arith.constant 0 : i32
    %c0_i32_0 = arith.constant 0 : i32
    %c0_i32_1 = arith.constant 0 : i32
    return %arg0, %c0_i32, %c0_i32_0 : i32, i32, i32
  }
  func.func @transform_3(%arg0: i32) -> (i32, i32, i32) {
    %c0_i32 = arith.constant 0 : i32
    %c0_i32_0 = arith.constant 0 : i32
    %c0_i32_1 = arith.constant 0 : i32
    return %arg0, %c0_i32, %c0_i32_0 : i32, i32, i32
  }
  func.func @transform_4(%arg0: i32) -> (i32, i32, i32) {
    %c0_i32 = arith.constant 0 : i32
    %c0_i32_0 = arith.constant 0 : i32
    %c0_i32_1 = arith.constant 0 : i32
    return %arg0, %c0_i32, %c0_i32_0 : i32, i32, i32
  }
  func.func @transform_5(%arg0: i32) -> (i32, i32, i32) {
    %c0_i32 = arith.constant 0 : i32
    %c0_i32_0 = arith.constant 0 : i32
    %c0_i32_1 = arith.constant 0 : i32
    return %arg0, %c0_i32, %c0_i32_0 : i32, i32, i32
  }
  func.func @transform_6(%arg0: i32) -> (i32, i32, i32) {
    %c0_i32 = arith.constant 0 : i32
    %c0_i32_0 = arith.constant 0 : i32
    %c0_i32_1 = arith.constant 0 : i32
    return %arg0, %c0_i32, %c0_i32_0 : i32, i32, i32
  }
  func.func @transform_7(%arg0: i32) -> (i32, i32) {
    %c0_i32 = arith.constant 0 : i32
    %c0_i32_0 = arith.constant 0 : i32
    %c0_i32_1 = arith.constant 0 : i32
    return %c0_i32, %c0_i32_0 : i32, i32
  }
  func.func @transform_8(%arg0: i32) -> (i32, i32) {
    %c0_i32 = arith.constant 0 : i32
    %c0_i32_0 = arith.constant 0 : i32
    %c0_i32_1 = arith.constant 0 : i32
    return %c0_i32, %c0_i32_0 : i32, i32
  }
  func.func @transform_9(%arg0: i32) -> (i32, i32, i32) {
    %c0_i32 = arith.constant 0 : i32
    %c0_i32_0 = arith.constant 0 : i32
    %c0_i32_1 = arith.constant 0 : i32
    %c0_i32_2 = arith.constant 0 : i32
    return %c0_i32, %c0_i32_0, %c0_i32_1 : i32, i32, i32
  }
  func.func @transform_10(%arg0: i32) -> (i32, i32, i32, i32, i32) {
    %c0_i32 = arith.constant 0 : i32
    %c0_i32_0 = arith.constant 0 : i32
    %c0_i32_1 = arith.constant 0 : i32
    %c0_i32_2 = arith.constant 0 : i32
    %c0_i32_3 = arith.constant 0 : i32
    return %arg0, %c0_i32, %c0_i32_0, %c0_i32_1, %c0_i32_2 : i32, i32, i32, i32, i32
  }
}

</mosaic_0001>

<llo_original>
// kernel: tpu_custom_call.1
$region0: #{tpu_custom_call.1}
  #allocation0 [shape = 'u32[]', space=smem, size = 0x4, offset = 0x4, fixed_abs, tag = 'smem constant byte address 0x4 - core index']
  #allocation1 [shape = 'u32[144,128]{1,0:T(1,128)}', space=vmem, size = 0x12000, scoped, tag = 'internal scratch']
  #allocation2 [shape = 'f32[16,32]{1,0:T(8,128)}', space=vmem, size = 0x2000, scoped, tag = 'scratch operand']
  %s0 = inlined_call_operand.hbm [shape: f32[2,8,32], index: 0, kind: input, shape index: {}]
  %s1 = inlined_call_operand.vmem [shape: bf16[2,32,96], index: 1, kind: input, shape index: {}]
  %s2 = inlined_call_operand.vmem [shape: bf16[2,32,32], index: 2, kind: input, shape index: {}]
  %s3 = inlined_call_operand.vmem [shape: bf16[2,32,64], index: 3, kind: input, shape index: {}]
  %s4 = inlined_call_operand.vmem [shape: bf16[2,64,32], index: 4, kind: input, shape index: {}]
  %s5 = inlined_call_operand.vmem [shape: f32[2,8,32], index: 5, kind: input, shape index: {}]
  %s6 = inlined_call_operand.vmem [shape: f32[2,1,64], index: 6, kind: input, shape index: {}]
  %s7 = inlined_call_operand.hbm [shape: bf16[32,50], index: 7, kind: input, shape index: {}]
  %s8 = inlined_call_operand.vmem [shape: f32[1,50], index: 8, kind: input, shape index: {}]
  %s9 = inlined_call_operand.hbm [shape: f32[2,8,50], index: 9, kind: output, shape index: {0}]
  %s10 = inlined_call_operand.hbm [shape: f32[2,2,2,8,8], index: 10, kind: output, shape index: {1}]
  %11 = xla_tuple %s9, %s10
  %s12 = sld [smem:[#allocation0]]
  $region93: #{tpu_custom_call.1} parent=0
    _
  %s14 = ssub.s32 1, %s12
  %s15 = scalar_select 0, %s14, %s12
  $region1: #{tpu_custom_call.1} parent=0
    #allocation3 [shape = 'u8[8192]{0}', space=vmem, size = 0x2000, scoped, tag = 'input window, operand 0, single buffered']
    #allocation4 [shape = 's32[2]{0}', space=sflag, size = 0x8, scoped, tag = 'scoped memory for tpu_custom_call.1']
    #allocation5 [shape = 's32[2]{0}', space=sflag, size = 0x8, scoped, tag = 'scoped memory for tpu_custom_call.1']
    #allocation6 [shape = 'u8[8192]{0}', space=vmem, size = 0x2000, scoped, tag = 'input window, operand 7, single buffered']
    #allocation7 [shape = 's32[1]{0}', space=sflag, size = 0x4, scoped, tag = 'scoped memory for tpu_custom_call.1']
    #allocation8 [shape = 'u8[8192]{0}', space=vmem, size = 0x2000, scoped, tag = 'output window, operand 0, single buffered']
    #allocation9 [shape = 'u8[32768]{0}', space=vmem, size = 0x8000, scoped, tag = 'output window, operand 1']
    #allocation10 [shape = 's32[2]{0}', space=sflag, size = 0x8, scoped, tag = 'scoped memory for tpu_custom_call.1']
    %16 = vsyncpa [#allocation4], 0
    %17 = vsyncpa [#allocation7], 0
    %18 = vsyncpa [#allocation5], 0
    %19 = vsyncpa [#allocation10], 0
    %s20 = scalar_lea.sflag [#allocation10], 1
    %21 = vsyncpa %s20, 0
    loop: start=0, step=1, limit=4
    $region2: #{tpu_custom_call.1} parent=1 // loop_pre_header
      _
    $region3: #{tpu_custom_call.1} parent=1 // loop_header
      %s23 = sphi 0, %s27
      %p24 = scmp.ge.s32.totalorder %s23, 4
      %s31 = sphi 0, %s31
      %s33 = sphi 0, %s31
      %s34 = sphi 0, %s33
      %s48 = sphi 0, %s34
      %s54 = sphi 0, %s56
      %s57 = sphi 0, %s54
      %s58 = sphi 0, %s57
      %s74 = sphi 0, %s58
      %s80 = sphi 0, %s82
      %s83 = sphi 0, %s80
      %s84 = sphi 0, %s83
      %s100 = sphi 0, %s84
      %s106 = sphi 0, %s108
      %s109 = sphi 0, %s106
      %s110 = sphi 0, %s109
      %s126 = sphi 0, %s110
      %s132 = sphi 0, %s134
      %s135 = sphi 0, %s132
      %s136 = sphi 0, %s135
      %s152 = sphi 0, %s136
      %s158 = sphi 0, %s160
      %s161 = sphi 0, %s158
      %s162 = sphi 0, %s161
      %s178 = sphi 0, %s162
      %s184 = sphi 0, %s186
      %s187 = sphi 0, %s184
      %s188 = sphi 0, %s187
      %s204 = sphi 0, %s188
      %s208 = sphi 0, %s208
      %s210 = sphi 0, %s208
      %s211 = sphi 0, %s210
      %s225 = sphi 0, %s211
      %s229 = sphi 0, %s229
      %s231 = sphi 0, %s229
      %s232 = sphi 0, %s231
      %s246 = sphi 0, %s232
      %s250 = sphi 0, %s250
      %s252 = sphi 0, %s250
      %s253 = sphi 0, %s252
      %s267 = sphi 0, %s253
      %s273 = sphi 0, %s275
      %s276 = sphi 0, %s273
      %s277 = sphi 0, %s276
      %s293 = sphi 0, %s277
    $region4: #{tpu_custom_call.1} parent=1 // loop_header_branch
      %26 = sbr.rel (%p24) target = $region8
    $region5: #{tpu_custom_call.1} parent=1 // loop_body
      %s28 = ssub.s32 %s23, 1
      %s29 = ssub.s32 %s23, 2
      %s30 = sadd.s32 %s23, 1
      %s32 = sadd.s32 %s31, 1
      %p35 = scmp.eq.s32.totalorder %s23, 1
      %p36 = scmp.ne.s32.totalorder %s31, %s33
      %p37 = scmp.eq.s32.totalorder %s23, 0
      %p38 = por %p36, %p37
      %p39 = scmp.ne.s32.totalorder %s31, %s33
      %p40 = scmp.eq.s32.totalorder %s28, 1
      %p41 = por %p39, %p40
      %p42 = scmp.ne.s32.totalorder %s33, %s34
      %p43 = scmp.eq.s32.totalorder %s28, 0
      %p44 = por %p42, %p43
      %p45 = scmp.ne.s32.totalorder %s33, %s34
      %p46 = scmp.eq.s32.totalorder %s29, 1
      %p47 = por %p45, %p46
      %p49 = scmp.ne.s32.totalorder %s34, %s48
      %p50 = scmp.eq.s32.totalorder %s29, 0
      %p51 = por %p49, %p50
      %s52 = ssub.s32 %s23, %s30
      %p53 = scmp.eq.s32.totalorder %s52, 0
      %s55 = sadd.s32 %s54, 1
      %s56 = scalar_select %p53, %s54, %s55
      %p59 = pneg %p53
      %p60 = scmp.eq.s32.totalorder %s23, 1
      %p61 = por %p59, %p60
      %p62 = scmp.ne.s32.totalorder %s54, %s57
      %p63 = scmp.eq.s32.totalorder %s23, 0
      %p64 = por %p62, %p63
      %p65 = scmp.ne.s32.totalorder %s54, %s57
      %p66 = scmp.eq.s32.totalorder %s28, 1
      %p67 = por %p65, %p66
      %p68 = scmp.ne.s32.totalorder %s57, %s58
      %p69 = scmp.eq.s32.totalorder %s28, 0
      %p70 = por %p68, %p69
      %p71 = scmp.ne.s32.totalorder %s57, %s58
      %p72 = scmp.eq.s32.totalorder %s29, 1
      %p73 = por %p71, %p72
      %p75 = scmp.ne.s32.totalorder %s58, %s74
      %p76 = scmp.eq.s32.totalorder %s29, 0
      %p77 = por %p75, %p76
      %s78 = ssub.s32 %s23, %s30
      %p79 = scmp.eq.s32.totalorder %s78, 0
      %s81 = sadd.s32 %s80, 1
      %s82 = scalar_select %p79, %s80, %s81
      %p85 = pneg %p79
      %p86 = scmp.eq.s32.totalorder %s23, 1
      %p87 = por %p85, %p86
      %p88 = scmp.ne.s32.totalorder %s80, %s83
      %p89 = scmp.eq.s32.totalorder %s23, 0
      %p90 = por %p88, %p89
      %p91 = scmp.ne.s32.totalorder %s80, %s83
      %p92 = scmp.eq.s32.totalorder %s28, 1
      %p93 = por %p91, %p92
      %p94 = scmp.ne.s32.totalorder %s83, %s84
      %p95 = scmp.eq.s32.totalorder %s28, 0
      %p96 = por %p94, %p95
      %p97 = scmp.ne.s32.totalorder %s83, %s84
      %p98 = scmp.eq.s32.totalorder %s29, 1
      %p99 = por %p97, %p98
      %p101 = scmp.ne.s32.totalorder %s84, %s100
      %p102 = scmp.eq.s32.totalorder %s29, 0
      %p103 = por %p101, %p102
      %s104 = ssub.s32 %s23, %s30
      %p105 = scmp.eq.s32.totalorder %s104, 0
      %s107 = sadd.s32 %s106, 1
      %s108 = scalar_select %p105, %s106, %s107
      %p111 = pneg %p105
      %p112 = scmp.eq.s32.totalorder %s23, 1
      %p113 = por %p111, %p112
      %p114 = scmp.ne.s32.totalorder %s106, %s109
      %p115 = scmp.eq.s32.totalorder %s23, 0
      %p116 = por %p114, %p115
      %p117 = scmp.ne.s32.totalorder %s106, %s109
      %p118 = scmp.eq.s32.totalorder %s28, 1
      %p119 = por %p117, %p118
      %p120 = scmp.ne.s32.totalorder %s109, %s110
      %p121 = scmp.eq.s32.totalorder %s28, 0
      %p122 = por %p120, %p121
      %p123 = scmp.ne.s32.totalorder %s109, %s110
      %p124 = scmp.eq.s32.totalorder %s29, 1
      %p125 = por %p123, %p124
      %p127 = scmp.ne.s32.totalorder %s110, %s126
      %p128 = scmp.eq.s32.totalorder %s29, 0
      %p129 = por %p127, %p128
      %s130 = ssub.s32 %s23, %s30
      %p131 = scmp.eq.s32.totalorder %s130, 0
      %s133 = sadd.s32 %s132, 1
      %s134 = scalar_select %p131, %s132, %s133
      %p137 = pneg %p131
      %p138 = scmp.eq.s32.totalorder %s23, 1
      %p139 = por %p137, %p138
      %p140 = scmp.ne.s32.totalorder %s132, %s135
      %p141 = scmp.eq.s32.totalorder %s23, 0
      %p142 = por %p140, %p141
      %p143 = scmp.ne.s32.totalorder %s132, %s135
      %p144 = scmp.eq.s32.totalorder %s28, 1
      %p145 = por %p143, %p144
      %p146 = scmp.ne.s32.totalorder %s135, %s136
      %p147 = scmp.eq.s32.totalorder %s28, 0
      %p148 = por %p146, %p147
      %p149 = scmp.ne.s32.totalorder %s135, %s136
      %p150 = scmp.eq.s32.totalorder %s29, 1
      %p151 = por %p149, %p150
      %p153 = scmp.ne.s32.totalorder %s136, %s152
      %p154 = scmp.eq.s32.totalorder %s29, 0
      %p155 = por %p153, %p154
      %s156 = ssub.s32 %s23, %s30
      %p157 = scmp.eq.s32.totalorder %s156, 0
      %s159 = sadd.s32 %s158, 1
      %s160 = scalar_select %p157, %s158, %s159
      %p163 = pneg %p157
      %p164 = scmp.eq.s32.totalorder %s23, 1
      %p165 = por %p163, %p164
      %p166 = scmp.ne.s32.totalorder %s158, %s161
      %p167 = scmp.eq.s32.totalorder %s23, 0
      %p168 = por %p166, %p167
      %p169 = scmp.ne.s32.totalorder %s158, %s161
      %p170 = scmp.eq.s32.totalorder %s28, 1
      %p171 = por %p169, %p170
      %p172 = scmp.ne.s32.totalorder %s161, %s162
      %p173 = scmp.eq.s32.totalorder %s28, 0
      %p174 = por %p172, %p173
      %p175 = scmp.ne.s32.totalorder %s161, %s162
      %p176 = scmp.eq.s32.totalorder %s29, 1
      %p177 = por %p175, %p176
      %p179 = scmp.ne.s32.totalorder %s162, %s178
      %p180 = scmp.eq.s32.totalorder %s29, 0
      %p181 = por %p179, %p180
      %s182 = ssub.s32 %s23, %s30
      %p183 = scmp.eq.s32.totalorder %s182, 0
      %s185 = sadd.s32 %s184, 1
      %s186 = scalar_select %p183, %s184, %s185
      %p189 = pneg %p183
      %p190 = scmp.eq.s32.totalorder %s23, 1
      %p191 = por %p189, %p190
      %p192 = scmp.ne.s32.totalorder %s184, %s187
      %p193 = scmp.eq.s32.totalorder %s23, 0
      %p194 = por %p192, %p193
      %p195 = scmp.ne.s32.totalorder %s184, %s187
      %p196 = scmp.eq.s32.totalorder %s28, 1
      %p197 = por %p195, %p196
      %p198 = scmp.ne.s32.totalorder %s187, %s188
      %p199 = scmp.eq.s32.totalorder %s28, 0
      %p200 = por %p198, %p199
      %p201 = scmp.ne.s32.totalorder %s187, %s188
      %p202 = scmp.eq.s32.totalorder %s29, 1
      %p203 = por %p201, %p202
      %p205 = scmp.ne.s32.totalorder %s188, %s204
      %p206 = scmp.eq.s32.totalorder %s29, 0
      %p207 = por %p205, %p206
      %s209 = sadd.s32 %s208, 1
      %p212 = scmp.eq.s32.totalorder %s23, 1
      %p213 = scmp.ne.s32.totalorder %s208, %s210
      %p214 = scmp.eq.s32.totalorder %s23, 0
      %p215 = por %p213, %p214
      %p216 = scmp.ne.s32.totalorder %s208, %s210
      %p217 = scmp.eq.s32.totalorder %s28, 1
      %p218 = por %p216, %p217
      %p219 = scmp.ne.s32.totalorder %s210, %s211
      %p220 = scmp.eq.s32.totalorder %s28, 0
      %p221 = por %p219, %p220
      %p222 = scmp.ne.s32.totalorder %s210, %s211
      %p223 = scmp.eq.s32.totalorder %s29, 1
      %p224 = por %p222, %p223
      %p226 = scmp.ne.s32.totalorder %s211, %s225
      %p227 = scmp.eq.s32.totalorder %s29, 0
      %p228 = por %p226, %p227
      %s230 = sadd.s32 %s229, 1
      %p233 = scmp.eq.s32.totalorder %s23, 1
      %p234 = scmp.ne.s32.totalorder %s229, %s231
      %p235 = scmp.eq.s32.totalorder %s23, 0
      %p236 = por %p234, %p235
      %p237 = scmp.ne.s32.totalorder %s229, %s231
      %p238 = scmp.eq.s32.totalorder %s28, 1
      %p239 = por %p237, %p238
      %p240 = scmp.ne.s32.totalorder %s231, %s232
      %p241 = scmp.eq.s32.totalorder %s28, 0
      %p242 = por %p240, %p241
      %p243 = scmp.ne.s32.totalorder %s231, %s232
      %p244 = scmp.eq.s32.totalorder %s29, 1
      %p245 = por %p243, %p244
      %p247 = scmp.ne.s32.totalorder %s232, %s246
      %p248 = scmp.eq.s32.totalorder %s29, 0
      %p249 = por %p247, %p248
      %s251 = sadd.s32 %s250, 1
      %p254 = scmp.eq.s32.totalorder %s23, 1
      %p255 = scmp.ne.s32.totalorder %s250, %s252
      %p256 = scmp.eq.s32.totalorder %s23, 0
      %p257 = por %p255, %p256
      %p258 = scmp.ne.s32.totalorder %s250, %s252
      %p259 = scmp.eq.s32.totalorder %s28, 1
      %p260 = por %p258, %p259
      %p261 = scmp.ne.s32.totalorder %s252, %s253
      %p262 = scmp.eq.s32.totalorder %s28, 0
      %p263 = por %p261, %p262
      %p264 = scmp.ne.s32.totalorder %s252, %s253
      %p265 = scmp.eq.s32.totalorder %s29, 1
      %p266 = por %p264, %p265
      %p268 = scmp.ne.s32.totalorder %s253, %s267
      %p269 = scmp.eq.s32.totalorder %s29, 0
      %p270 = por %p268, %p269
      %s271 = ssub.s32 %s23, %s30
      %p272 = scmp.eq.s32.totalorder %s271, 0
      %s274 = sadd.s32 %s273, 1
      %s275 = scalar_select %p272, %s273, %s274
      %p278 = pneg %p272
      %p279 = scmp.eq.s32.totalorder %s23, 1
      %p280 = por %p278, %p279
      %p281 = scmp.ne.s32.totalorder %s273, %s276
      %p282 = scmp.eq.s32.totalorder %s23, 0
      %p283 = por %p281, %p282
      %p284 = scmp.ne.s32.totalorder %s273, %s276
      %p285 = scmp.eq.s32.totalorder %s28, 1
      %p286 = por %p284, %p285
      %p287 = scmp.ne.s32.totalorder %s276, %s277
      %p288 = scmp.eq.s32.totalorder %s28, 0
      %p289 = por %p287, %p288
      %p290 = scmp.ne.s32.totalorder %s276, %s277
      %p291 = scmp.eq.s32.totalorder %s29, 1
      %p292 = por %p290, %p291
      %p294 = scmp.ne.s32.totalorder %s277, %s293
      %p295 = scmp.eq.s32.totalorder %s29, 0
      %p296 = por %p294, %p295
      %p297 = scmp.le.s32.totalorder 1, %s23
      %p298 = scmp.lt.s32.totalorder %s23, 3
      %p299 = pnand %p297, %p298
      %p300 = pneg %p299
      // Predicated region
      $region9: #{tpu_custom_call.1} parent=5 // pred_check
        _
      $region10: #{tpu_custom_call.1} parent=5 // pred_check_branch
        %302 = sbr.rel (%p299) target = $region12
      $region11: #{tpu_custom_call.1} parent=5 // pred_region
        %s303 = ssub.s32 %s23, 1
        // Predicated region
        $region13: #{tpu_custom_call.1} parent=11 // pred_check
          %p304 = pneg %p44
        $region14: #{tpu_custom_call.1} parent=11 // pred_check_branch
          %306 = sbr.rel (%p304) target = $region16
        $region15: #{tpu_custom_call.1} parent=11 // pred_region
          %s308 = ssub.s32 256, 256
          %309 = vsyncadd [#allocation4], %s308
          %s310 = sshll.u32 [#allocation3], 4
          %s311 = int_to_ptr.vmem [resolvable:$true] %s310
          %316 = dma.hbm_to_vmem [thread:$0]  %s0, 256, %s311, [#allocation4], 128, 128, 8
        $region16: #{tpu_custom_call.1} parent=11 // pred_fallthru
          _
        // Predicated region
        $region17: #{tpu_custom_call.1} parent=11 // pred_check
          %p317 = pneg %p221
        $region18: #{tpu_custom_call.1} parent=11 // pred_check_branch
          %319 = sbr.rel (%p317) target = $region20
        $region19: #{tpu_custom_call.1} parent=11 // pred_region
          %s321 = ssub.s32 256, 256
          %322 = vsyncadd [#allocation7], %s321
          %s323 = sshll.u32 [#allocation6], 4
          %s324 = int_to_ptr.vmem [resolvable:$true] %s323
          %329 = dma.hbm_to_vmem [thread:$0]  %s7, 256, %s324, [#allocation7], 64, 64, 4
        $region20: #{tpu_custom_call.1} parent=11 // pred_fallthru
          _
        // Predicated region
        $region21: #{tpu_custom_call.1} parent=11 // pred_check
          %p330 = pneg %p242
        $region22: #{tpu_custom_call.1} parent=11 // pred_check_branch
          %332 = sbr.rel (%p330) target = $region24
        $region23: #{tpu_custom_call.1} parent=11 // pred_region
          _
        $region24: #{tpu_custom_call.1} parent=11 // pred_fallthru
          _
      $region12: #{tpu_custom_call.1} parent=5 // pred_fallthru
        _
      %p333 = scmp.lt.s32.totalorder %s23, 2
      // Predicated region
      $region25: #{tpu_custom_call.1} parent=5 // pred_check
        %p334 = pneg %p333
      $region26: #{tpu_custom_call.1} parent=5 // pred_check_branch
        %336 = sbr.rel (%p334) target = $region28
      $region27: #{tpu_custom_call.1} parent=5 // pred_region
        // Predicated region
        $region29: #{tpu_custom_call.1} parent=27 // pred_check
          %p337 = pneg %p64
        $region30: #{tpu_custom_call.1} parent=27 // pred_check_branch
          %339 = sbr.rel (%p337) target = $region32
        $region31: #{tpu_custom_call.1} parent=27 // pred_region
          %p340 = scmp.lt.s32.totalorder %s23, 1
          %s341 = scalar_select %p340, %s23, 1
          %s342 = smul.addr %s341, 4
          %s343 = smul.addr %s342, 4
          %s344 = scalar_lea.vmem %s1, %s343
        $region32: #{tpu_custom_call.1} parent=27 // pred_fallthru
          _
        // Predicated region
        $region33: #{tpu_custom_call.1} parent=27 // pred_check
          %p345 = pneg %p90
        $region34: #{tpu_custom_call.1} parent=27 // pred_check_branch
          %347 = sbr.rel (%p345) target = $region36
        $region35: #{tpu_custom_call.1} parent=27 // pred_region
          %p348 = scmp.lt.s32.totalorder %s23, 1
          %s349 = scalar_select %p348, %s23, 1
          %s350 = smul.addr %s349, 4
          %s351 = smul.addr %s350, 4
          %s352 = scalar_lea.vmem %s2, %s351
        $region36: #{tpu_custom_call.1} parent=27 // pred_fallthru
          _
        // Predicated region
        $region37: #{tpu_custom_call.1} parent=27 // pred_check
          %p353 = pneg %p116
        $region38: #{tpu_custom_call.1} parent=27 // pred_check_branch
          %355 = sbr.rel (%p353) target = $region40
        $region39: #{tpu_custom_call.1} parent=27 // pred_region
          %p356 = scmp.lt.s32.totalorder %s23, 1
          %s357 = scalar_select %p356, %s23, 1
          %s358 = smul.addr %s357, 4
          %s359 = smul.addr %s358, 4
          %s360 = scalar_lea.vmem %s3, %s359
        $region40: #{tpu_custom_call.1} parent=27 // pred_fallthru
          _
        // Predicated region
        $region41: #{tpu_custom_call.1} parent=27 // pred_check
          %p361 = pneg %p142
        $region42: #{tpu_custom_call.1} parent=27 // pred_check_branch
          %363 = sbr.rel (%p361) target = $region44
        $region43: #{tpu_custom_call.1} parent=27 // pred_region
          %p364 = scmp.lt.s32.totalorder %s23, 1
          %s365 = scalar_select %p364, %s23, 1
          %s366 = smul.addr %s365, 8
          %s367 = smul.addr %s366, 4
          %s368 = scalar_lea.vmem %s4, %s367
        $region44: #{tpu_custom_call.1} parent=27 // pred_fallthru
          _
        // Predicated region
        $region45: #{tpu_custom_call.1} parent=27 // pred_check
          %p369 = pneg %p168
        $region46: #{tpu_custom_call.1} parent=27 // pred_check_branch
          %371 = sbr.rel (%p369) target = $region48
        $region47: #{tpu_custom_call.1} parent=27 // pred_region
          %p372 = scmp.lt.s32.totalorder %s23, 1
          %s373 = scalar_select %p372, %s23, 1
          %s374 = smul.addr %s373, 8
          %s375 = scalar_lea.vmem %s5, %s374
        $region48: #{tpu_custom_call.1} parent=27 // pred_fallthru
          _
        // Predicated region
        $region49: #{tpu_custom_call.1} parent=27 // pred_check
          %p376 = pneg %p194
        $region50: #{tpu_custom_call.1} parent=27 // pred_check_branch
          %378 = sbr.rel (%p376) target = $region52
        $region51: #{tpu_custom_call.1} parent=27 // pred_region
          %p379 = scmp.lt.s32.totalorder %s23, 1
          %s380 = scalar_select %p379, %s23, 1
          %s381 = scalar_lea.vmem %s6, %s380
        $region52: #{tpu_custom_call.1} parent=27 // pred_fallthru
          _
      $region28: #{tpu_custom_call.1} parent=5 // pred_fallthru
        _
      %p382 = scmp.le.s32.totalorder 1, %s23
      %p383 = scmp.lt.s32.totalorder %s23, 3
      %p384 = pnand %p382, %p383
      %p385 = pneg %p384
      // Predicated region
      $region53: #{tpu_custom_call.1} parent=5 // pred_check
        _
      $region54: #{tpu_custom_call.1} parent=5 // pred_check_branch
        %387 = sbr.rel (%p384) target = $region56
      $region55: #{tpu_custom_call.1} parent=5 // pred_region
        %s388 = ssub.s32 %s23, 1
        // Predicated region
        $region57: #{tpu_custom_call.1} parent=55 // pred_check
          %p389 = pneg %p44
        $region58: #{tpu_custom_call.1} parent=55 // pred_check_branch
          %391 = sbr.rel (%p389) target = $region60
        $region59: #{tpu_custom_call.1} parent=55 // pred_region
          %392 = dma.done [#allocation4], 256
        $region60: #{tpu_custom_call.1} parent=55 // pred_fallthru
          _
        // Predicated region
        $region61: #{tpu_custom_call.1} parent=55 // pred_check
          %p393 = pneg %p221
        $region62: #{tpu_custom_call.1} parent=55 // pred_check_branch
          %395 = sbr.rel (%p393) target = $region64
        $region63: #{tpu_custom_call.1} parent=55 // pred_region
          %396 = dma.done [#allocation7], 256
        $region64: #{tpu_custom_call.1} parent=55 // pred_fallthru
          _
        %p397 = pneg %p44
        %p398 = pneg %p41
        %p399 = scmp.lt.s32.totalorder %s28, 1
        %s400 = scalar_select %p399, %s28, 1
        %s401 = smul.addr %s400, 4
        %s402 = smul.addr %s401, 4
        %s403 = scalar_lea.vmem %s1, %s402
        %p404 = pneg %p70
        %p405 = pneg %p67
        %p406 = scmp.lt.s32.totalorder %s28, 1
        %s407 = scalar_select %p406, %s28, 1
        %s408 = smul.addr %s407, 4
        %s409 = smul.addr %s408, 4
        %s410 = scalar_lea.vmem %s2, %s409
        %p411 = pneg %p96
        %p412 = pneg %p93
        %p413 = scmp.lt.s32.totalorder %s28, 1
        %s414 = scalar_select %p413, %s28, 1
        %s415 = smul.addr %s414, 4
        %s416 = smul.addr %s415, 4
        %s417 = scalar_lea.vmem %s3, %s416
        %p418 = pneg %p122
        %p419 = pneg %p119
        %p420 = scmp.lt.s32.totalorder %s28, 1
        %s421 = scalar_select %p420, %s28, 1
        %s422 = smul.addr %s421, 8
        %s423 = smul.addr %s422, 4
        %s424 = scalar_lea.vmem %s4, %s423
        %p425 = pneg %p148
        %p426 = pneg %p145
        %p427 = scmp.lt.s32.totalorder %s28, 1
        %s428 = scalar_select %p427, %s28, 1
        %s429 = smul.addr %s428, 8
        %s430 = scalar_lea.vmem %s5, %s429
        %p431 = pneg %p174
        %p432 = pneg %p171
        %p433 = scmp.lt.s32.totalorder %s28, 1
        %s434 = scalar_select %p433, %s28, 1
        %s435 = scalar_lea.vmem %s6, %s434
        %p436 = pneg %p200
        %p437 = pneg %p197
        %p438 = pneg %p221
        %p439 = pneg %p218
        %p440 = pneg %p242
        %p441 = pneg %p239
        %p442 = pneg %p263
        %p443 = pneg %p260
        %p444 = pneg %p289
        %p445 = pneg %p286
        %s446 = sand.u32 %s276, 1
        %s447 = scalar_lea.sflag [#allocation10], %s446
        %s448 = sand.u32 %s276, 1
        %s449 = smul.addr %s448, 32
        %s450 = scalar_lea.vmem [#allocation9], %s449
        %p451 = scmp.lt.s32.totalorder %s28, 1
        %s452 = scalar_select %p451, %s28, 1
        %s453 = smul.addr %s452, 4
        %s454 = smul.addr %s453, 4
        %s455 = scalar_lea.vmem %s1, %s454
        %p456 = scmp.lt.s32.totalorder %s28, 1
        %s457 = scalar_select %p456, %s28, 1
        %s458 = smul.addr %s457, 4
        %s459 = smul.addr %s458, 4
        %s460 = scalar_lea.vmem %s2, %s459
        %p461 = scmp.lt.s32.totalorder %s28, 1
        %s462 = scalar_select %p461, %s28, 1
        %s463 = smul.addr %s462, 4
        %s464 = smul.addr %s463, 4
        %s465 = scalar_lea.vmem %s3, %s464
        %p466 = scmp.lt.s32.totalorder %s28, 1
        %s467 = scalar_select %p466, %s28, 1
        %s468 = smul.addr %s467, 8
        %s469 = smul.addr %s468, 4
        %s470 = scalar_lea.vmem %s4, %s469
        %p471 = scmp.lt.s32.totalorder %s28, 1
        %s472 = scalar_select %p471, %s28, 1
        %s473 = smul.addr %s472, 8
        %s474 = scalar_lea.vmem %s5, %s473
        %p475 = scmp.lt.s32.totalorder %s28, 1
        %s476 = scalar_select %p475, %s28, 1
        %s477 = scalar_lea.vmem %s6, %s476
        %p479 = scmp.eq.s32.totalorder %s28, 0
        // Predicated region
        $region65: #{tpu_custom_call.1} parent=55 // pred_check
          %p480 = pneg %p479
        $region66: #{tpu_custom_call.1} parent=55 // pred_check_branch
          %482 = sbr.rel (%p480) target = $region68
        $region67: #{tpu_custom_call.1} parent=55 // pred_region
          %v483 = vld [vmem:[#allocation3] sm:$0xff]
          %v484 = vld [vmem:[#allocation3 + $0x8] sm:$0xff]
          %vm485 = vcmask 261120
          %486 = vst.msk [vmem:[#allocation2] sm:$0xff] %vm485, %v483
          %487 = vst.msk [vmem:[#allocation2 + $0x8] sm:$0xff] %vm485, %v484
        $region68: #{tpu_custom_call.1} parent=55 // pred_fallthru
          _
        %v488 = vld [vmem:[%s474] sm:$0x1]
        %v489 = vld [vmem:[%s474 + $0x1] sm:$0x1]
        %v490 = vld [vmem:[%s474 + $0x2] sm:$0x1]
        %v491 = vld [vmem:[%s474 + $0x3] sm:$0x1]
        %v492 = vld [vmem:[%s474 + $0x4] sm:$0x1]
        %v493 = vld [vmem:[%s474 + $0x5] sm:$0x1]
        %v494 = vld [vmem:[#allocation2] sm:$0xff]
        %v495 = vld [vmem:[#allocation2 + $0x8] sm:$0xff]
        %vm496 = vcmask 261120
        %v497 = vsel %vm496, %v494, 0.0
        %498 = vadd.xlane.f32.xlu0 %v497
        %v499 = vpop.xlane.xlu0 %498
        %v500 = vsel %vm496, %v495, 0.0
        %501 = vadd.xlane.f32.xlu0 %v500
        %v502 = vpop.xlane.xlu0 %501
        %v503 = vrcp.pop 32.0
        %v504 = vmul.f32 %v499, %v503
        %v505 = vmul.f32 %v502, %v503
        %v506 = vsub.f32 %v494, %v504
        %v507 = vsub.f32 %v495, %v505
        %v508 = vmul.f32 %v506, %v506
        %v509 = vmul.f32 %v507, %v507
        %v510 = vsel %vm496, %v508, 0.0
        %511 = vadd.xlane.f32.xlu0 %v510
        %v512 = vpop.xlane.xlu0 %511
        %v513 = vsel %vm496, %v509, 0.0
        %514 = vadd.xlane.f32.xlu0 %v513
        %v515 = vpop.xlane.xlu0 %514
        %v516 = vmul.f32 %v512, %v503
        %v517 = vmul.f32 %v515, %v503
        %v518 = vadd.f32 %v516, 1e-05
        %v519 = vadd.f32 %v517, 1e-05
        %v520 = vrsqrt.pop %v518
        %v521 = vrsqrt.pop %v519
        %v522 = vmul.f32 %v506, %v520
        %v523 = vmul.f32 %v507, %v521
        %v524 = vlaneseq
        %v525 = vshrl.u32 %v524, 7
        %v526 = vsub.s32 0, %v525
        %v527 = vrot.slane %v488, %v526
        %v528 = vmul.f32 %v522, %v527
        %v529 = vmul.f32 %v523, %v527
        %v530 = vlaneseq
        %v531 = vshrl.u32 %v530, 7
        %v532 = vsub.s32 0, %v531
        %v533 = vrot.slane %v489, %v532
        %v534 = vadd.f32 %v528, %v533
        %v535 = vadd.f32 %v529, %v533
        %v536 = vpack.c.bf16 %v535, %v534
        %v537 = vld [vmem:[%s455] sm:$0xf]
        %v538 = vld [vmem:[%s455 + $0x4] sm:$0xf]
        %v539 = vld [vmem:[%s455 + $0x8] sm:$0xf]
        %v540 = vld [vmem:[%s455 + $0xc] sm:$0xf]
        %v545 = vunpack.c.l.b16 %v537
        %v546 = vunpack.c.l.b16 %v538
        %v547 = vunpack.c.l.b16 %v539
        %v548 = vunpack.c.l.b16 %v540
        %v549 = vpack.c.b16 %v546, %v545
        %v550 = vpack.c.b16 %v548, %v547
        %v554 = vsel %vm496, %v536, 0
        %556 = vmatprep.subr.bf16.mxu0 0
        %557 = vmatpush1.bf16.msra.mxu0 %v549
        %558 = vmatprep.subr.bf16.mxu0 0
        %559 = vmatpush1.bf16.msra.mxu0 %v550
        %560 = vmatprep.subr.bf16.mxu0 0
        %561 = vmatpush1.bf16.msra.mxu0 0
        %562 = vmatprep.subr.bf16.mxu0 0
        %563 = vmatpush1.bf16.msra.mxu0 0
        %564 = vmatprep.subr.bf16.mxu0 0
        %565 = vmatpush1.bf16.msra.mxu0 0
        %566 = vmatprep.subr.bf16.mxu0 0
        %567 = vmatpush1.bf16.msra.mxu0 0
        %568 = vmatprep.subr.bf16.mxu0 0
        %569 = vmatpush1.bf16.msra.mxu0 0
        %570 = vmatprep.subr.bf16.mxu0 0
        %571 = vmatpush1.bf16.msra.mxu0 0
        %572 = vmatprep.subr.bf16.mxu0 0
        %573 = vmatpush1.bf16.msra.mxu0 0
        %574 = vmatprep.subr.bf16.mxu0 0
        %575 = vmatpush1.bf16.msra.mxu0 0
        %576 = vmatprep.subr.bf16.mxu0 0
        %577 = vmatpush1.bf16.msra.mxu0 0
        %578 = vmatprep.subr.bf16.mxu0 0
        %579 = vmatpush1.bf16.msra.mxu0 0
        %580 = vmatprep.subr.bf16.mxu0 0
        %581 = vmatpush1.bf16.msra.mxu0 0
        %582 = vmatprep.subr.bf16.mxu0 0
        %583 = vmatpush1.bf16.msra.mxu0 0
        %584 = vmatprep.subr.bf16.mxu0 0
        %585 = vmatpush1.bf16.msra.mxu0 0
        %586 = vmatprep.subr.bf16.mxu0 0
        %587 = vmatpush1.bf16.msra.mxu0 0
        %588 = vmatprep.mubr.bf16.mxu0 0
        %589 = vmatmul.mubr.bf16.gmra.mrb[0].mxu0 %v554
        %v590 = vpop.f32.mrb[0].mxu0
        %v591 = vadd.f32 0.0, %v590
        %v592 = vpop.f32.mrb[0].mxu0
        %v593 = vpop.f32.mrb[0].mxu0
        %v594 = vadd.f32 0.0, %v593
        %v595 = vpop.f32.mrb[0].mxu0
        %596 = vdwg.mxu0
        %v597 = vlaneseq
        %v598 = vshrl.u32 %v597, 7
        %v599 = vlaneseq
        %v600 = vand.u32 %v599, 127
        %vm601 = vcmp.le.s32.totalorder %v600, %v598
        %v602 = vpack.c.bf16 %v591, %v591
        %v603 = vpack.c.bf16 %v594, %v594
        %605 = vrot.lane.b32.xlu0 %v602, 96
        %v606 = vpop.permute.xlu0 %605
        %vm607 = vcmask 130048
        %v609 = vsel %vm607, %v602, 0
        %v612 = vsel %vm607, %v606, 0
        %614 = vmatprep.subr.bf16.mxu0 0
        %615 = vmatpush1.bf16.xpose.msra.mxu0 %v612
        %616 = vmatprep.subr.bf16.mxu0 0
        %617 = vmatpush1.bf16.xpose.msra.mxu0 0
        %618 = vmatprep.subr.bf16.mxu0 0
        %619 = vmatpush1.bf16.xpose.msra.mxu0 0
        %620 = vmatprep.subr.bf16.mxu0 0
        %621 = vmatpush1.bf16.xpose.msra.mxu0 0
        %622 = vmatprep.subr.bf16.mxu0 0
        %623 = vmatpush1.bf16.xpose.msra.mxu0 0
        %624 = vmatprep.subr.bf16.mxu0 0
        %625 = vmatpush1.bf16.xpose.msra.mxu0 0
        %626 = vmatprep.subr.bf16.mxu0 0
        %627 = vmatpush1.bf16.xpose.msra.mxu0 0
        %628 = vmatprep.subr.bf16.mxu0 0
        %629 = vmatpush1.bf16.xpose.msra.mxu0 0
        %630 = vmatprep.subr.bf16.mxu0 0
        %631 = vmatpush1.bf16.xpose.msra.mxu0 0
        %632 = vmatprep.subr.bf16.mxu0 0
        %633 = vmatpush1.bf16.xpose.msra.mxu0 0
        %634 = vmatprep.subr.bf16.mxu0 0
        %635 = vmatpush1.bf16.xpose.msra.mxu0 0
        %636 = vmatprep.subr.bf16.mxu0 0
        %637 = vmatpush1.bf16.xpose.msra.mxu0 0
        %638 = vmatprep.subr.bf16.mxu0 0
        %639 = vmatpush1.bf16.xpose.msra.mxu0 0
        %640 = vmatprep.subr.bf16.mxu0 0
        %641 = vmatpush1.bf16.xpose.msra.mxu0 0
        %642 = vmatprep.subr.bf16.mxu0 0
        %643 = vmatpush1.bf16.xpose.msra.mxu0 0
        %644 = vmatprep.subr.bf16.mxu0 0
        %645 = vmatpush1.bf16.xpose.msra.mxu0 0
        %646 = vmatprep.mubr.bf16.mxu0 0
        %647 = vmatmul.mubr.bf16.gmra.mrb[0].mxu0 %v609
        %v648 = vpop.f32.mrb[0].mxu0
        %v649 = vadd.f32 0.0, %v648
        %v650 = vpop.f32.mrb[0].mxu0
        %v651 = vpop.f32.mrb[0].mxu0
        %v652 = vpop.f32.mrb[0].mxu0
        %653 = vdwg.mxu0
        %655 = vrot.lane.b32.xlu0 %v603, 96
        %v656 = vpop.permute.xlu0 %655
        %v658 = vsel %vm607, %v603, 0
        %v661 = vsel %vm607, %v656, 0
        %663 = vmatprep.subr.bf16.mxu0 0
        %664 = vmatpush1.bf16.xpose.msra.mxu0 %v661
        %665 = vmatprep.subr.bf16.mxu0 0
        %666 = vmatpush1.bf16.xpose.msra.mxu0 0
        %667 = vmatprep.subr.bf16.mxu0 0
        %668 = vmatpush1.bf16.xpose.msra.mxu0 0
        %669 = vmatprep.subr.bf16.mxu0 0
        %670 = vmatpush1.bf16.xpose.msra.mxu0 0
        %671 = vmatprep.subr.bf16.mxu0 0
        %672 = vmatpush1.bf16.xpose.msra.mxu0 0
        %673 = vmatprep.subr.bf16.mxu0 0
        %674 = vmatpush1.bf16.xpose.msra.mxu0 0
        %675 = vmatprep.subr.bf16.mxu0 0
        %676 = vmatpush1.bf16.xpose.msra.mxu0 0
        %677 = vmatprep.subr.bf16.mxu0 0
        %678 = vmatpush1.bf16.xpose.msra.mxu0 0
        %679 = vmatprep.subr.bf16.mxu0 0
        %680 = vmatpush1.bf16.xpose.msra.mxu0 0
        %681 = vmatprep.subr.bf16.mxu0 0
        %682 = vmatpush1.bf16.xpose.msra.mxu0 0
        %683 = vmatprep.subr.bf16.mxu0 0
        %684 = vmatpush1.bf16.xpose.msra.mxu0 0
        %685 = vmatprep.subr.bf16.mxu0 0
        %686 = vmatpush1.bf16.xpose.msra.mxu0 0
        %687 = vmatprep.subr.bf16.mxu0 0
        %688 = vmatpush1.bf16.xpose.msra.mxu0 0
        %689 = vmatprep.subr.bf16.mxu0 0
        %690 = vmatpush1.bf16.xpose.msra.mxu0 0
        %691 = vmatprep.subr.bf16.mxu0 0
        %692 = vmatpush1.bf16.xpose.msra.mxu0 0
        %693 = vmatprep.subr.bf16.mxu0 0
        %694 = vmatpush1.bf16.xpose.msra.mxu0 0
        %695 = vmatprep.mubr.bf16.mxu0 0
        %696 = vmatmul.mubr.bf16.gmra.mrb[0].mxu0 %v658
        %v697 = vpop.f32.mrb[0].mxu0
        %v698 = vadd.f32 0.0, %v697
        %v699 = vpop.f32.mrb[0].mxu0
        %v700 = vpop.f32.mrb[0].mxu0
        %v701 = vpop.f32.mrb[0].mxu0
        %702 = vdwg.mxu0
        %v703 = vmul.f32 %v649, 0.25
        %v704 = vmul.f32 %v698, 0.25
        %v705 = vsel %vm601, 1, 0
        %vm706 = vcmp.eq.s32.totalorder %v705, 1
        %v707 = vsel %vm706, %v703, -inf
        %v708 = vsel %vm706, %v704, -inf
        %vm709 = vcmask 64512
        %v710 = vsel %vm709, %v707, -inf
        %711 = vmax.xlane.f32.xlu0 %v710
        %v712 = vpop.xlane.xlu0 %711
        %v713 = vsel %vm709, %v708, -inf
        %714 = vmax.xlane.f32.xlu0 %v713
        %v715 = vpop.xlane.xlu0 %714
        %v716 = vsub.f32 %v707, %v712
        %v717 = vsub.f32 %v708, %v715
        %v718 = vmul.f32 %v716, 1.442695
        %v719 = vpow.pop %v718
        %v720 = vmul.f32 %v717, 1.442695
        %v721 = vpow.pop %v720
        %v722 = vsel %vm709, %v719, 0.0
        %723 = vadd.xlane.f32.xlu0 %v722
        %v724 = vpop.xlane.xlu0 %723
        %v725 = vsel %vm709, %v721, 0.0
        %726 = vadd.xlane.f32.xlu0 %v725
        %v727 = vpop.xlane.xlu0 %726
        %v728 = vrcp.pop %v724
        %v729 = vrcp.pop %v727
        %v730 = vmul.f32 %v719, %v728
        %v731 = vmul.f32 %v721, %v729
        %732 = vst.msk [vmem:[%s450] sm:$0xff] %vm709, %v730
        %733 = vst.msk [vmem:[%s450 + $0x8] sm:$0xff] %vm709, %v731
        %v734 = vpack.c.bf16 %v730, %v730
        %v735 = vpack.c.bf16 %v731, %v731
        %736 = vrot.lane.b32.xlu0 %v602, 64
        %v737 = vpop.permute.xlu0 %736
        %v739 = vsel %vm709, %v734, 0
        %vm741 = vcmask 1043456
        %v743 = vsel %vm741, %v737, 0
        %745 = vmatprep.subr.bf16.mxu0 0
        %746 = vmatpush1.bf16.msra.mxu0 %v743
        %747 = vmatprep.subr.bf16.mxu0 0
        %748 = vmatpush1.bf16.msra.mxu0 0
        %749 = vmatprep.subr.bf16.mxu0 0
        %750 = vmatpush1.bf16.msra.mxu0 0
        %751 = vmatprep.subr.bf16.mxu0 0
        %752 = vmatpush1.bf16.msra.mxu0 0
        %753 = vmatprep.subr.bf16.mxu0 0
        %754 = vmatpush1.bf16.msra.mxu0 0
        %755 = vmatprep.subr.bf16.mxu0 0
        %756 = vmatpush1.bf16.msra.mxu0 0
        %757 = vmatprep.subr.bf16.mxu0 0
        %758 = vmatpush1.bf16.msra.mxu0 0
        %759 = vmatprep.subr.bf16.mxu0 0
        %760 = vmatpush1.bf16.msra.mxu0 0
        %761 = vmatprep.subr.bf16.mxu0 0
        %762 = vmatpush1.bf16.msra.mxu0 0
        %763 = vmatprep.subr.bf16.mxu0 0
        %764 = vmatpush1.bf16.msra.mxu0 0
        %765 = vmatprep.subr.bf16.mxu0 0
        %766 = vmatpush1.bf16.msra.mxu0 0
        %767 = vmatprep.subr.bf16.mxu0 0
        %768 = vmatpush1.bf16.msra.mxu0 0
        %769 = vmatprep.subr.bf16.mxu0 0
        %770 = vmatpush1.bf16.msra.mxu0 0
        %771 = vmatprep.subr.bf16.mxu0 0
        %772 = vmatpush1.bf16.msra.mxu0 0
        %773 = vmatprep.subr.bf16.mxu0 0
        %774 = vmatpush1.bf16.msra.mxu0 0
        %775 = vmatprep.subr.bf16.mxu0 0
        %776 = vmatpush1.bf16.msra.mxu0 0
        %777 = vmatprep.mubr.bf16.mxu0 0
        %778 = vmatmul.mubr.bf16.gmra.mrb[0].mxu0 %v739
        %v779 = vpop.f32.mrb[0].mxu0
        %v780 = vadd.f32 0.0, %v779
        %v781 = vpop.f32.mrb[0].mxu0
        %v782 = vpop.f32.mrb[0].mxu0
        %v783 = vpop.f32.mrb[0].mxu0
        %784 = vdwg.mxu0
        %785 = vrot.lane.b32.xlu0 %v603, 64
        %v786 = vpop.permute.xlu0 %785
        %v788 = vsel %vm709, %v735, 0
        %v791 = vsel %vm741, %v786, 0
        %793 = vmatprep.subr.bf16.mxu0 0
        %794 = vmatpush1.bf16.msra.mxu0 %v791
        %795 = vmatprep.subr.bf16.mxu0 0
        %796 = vmatpush1.bf16.msra.mxu0 0
        %797 = vmatprep.subr.bf16.mxu0 0
        %798 = vmatpush1.bf16.msra.mxu0 0
        %799 = vmatprep.subr.bf16.mxu0 0
        %800 = vmatpush1.bf16.msra.mxu0 0
        %801 = vmatprep.subr.bf16.mxu0 0
        %802 = vmatpush1.bf16.msra.mxu0 0
        %803 = vmatprep.subr.bf16.mxu0 0
        %804 = vmatpush1.bf16.msra.mxu0 0
        %805 = vmatprep.subr.bf16.mxu0 0
        %806 = vmatpush1.bf16.msra.mxu0 0
        %807 = vmatprep.subr.bf16.mxu0 0
        %808 = vmatpush1.bf16.msra.mxu0 0
        %809 = vmatprep.subr.bf16.mxu0 0
        %810 = vmatpush1.bf16.msra.mxu0 0
        %811 = vmatprep.subr.bf16.mxu0 0
        %812 = vmatpush1.bf16.msra.mxu0 0
        %813 = vmatprep.subr.bf16.mxu0 0
        %814 = vmatpush1.bf16.msra.mxu0 0
        %815 = vmatprep.subr.bf16.mxu0 0
        %816 = vmatpush1.bf16.msra.mxu0 0
        %817 = vmatprep.subr.bf16.mxu0 0
        %818 = vmatpush1.bf16.msra.mxu0 0
        %819 = vmatprep.subr.bf16.mxu0 0
        %820 = vmatpush1.bf16.msra.mxu0 0
        %821 = vmatprep.subr.bf16.mxu0 0
        %822 = vmatpush1.bf16.msra.mxu0 0
        %823 = vmatprep.subr.bf16.mxu0 0
        %824 = vmatpush1.bf16.msra.mxu0 0
        %825 = vmatprep.mubr.bf16.mxu0 0
        %826 = vmatmul.mubr.bf16.gmra.mrb[0].mxu0 %v788
        %v827 = vpop.f32.mrb[0].mxu0
        %v828 = vadd.f32 0.0, %v827
        %v829 = vpop.f32.mrb[0].mxu0
        %v830 = vpop.f32.mrb[0].mxu0
        %v831 = vpop.f32.mrb[0].mxu0
        %832 = vdwg.mxu0
        %833 = vrot.lane.b32.xlu0 %v602, 112
        %v834 = vpop.permute.xlu0 %833
        %835 = vrot.lane.b32.xlu0 %v602, 80
        %v836 = vpop.permute.xlu0 %835
        %v838 = vsel %vm607, %v834, 0
        %v841 = vsel %vm607, %v836, 0
        %843 = vmatprep.subr.bf16.mxu0 0
        %844 = vmatpush1.bf16.xpose.msra.mxu0 %v841
        %845 = vmatprep.subr.bf16.mxu0 0
        %846 = vmatpush1.bf16.xpose.msra.mxu0 0
        %847 = vmatprep.subr.bf16.mxu0 0
        %848 = vmatpush1.bf16.xpose.msra.mxu0 0
        %849 = vmatprep.subr.bf16.mxu0 0
        %850 = vmatpush1.bf16.xpose.msra.mxu0 0
        %851 = vmatprep.subr.bf16.mxu0 0
        %852 = vmatpush1.bf16.xpose.msra.mxu0 0
        %853 = vmatprep.subr.bf16.mxu0 0
        %854 = vmatpush1.bf16.xpose.msra.mxu0 0
        %855 = vmatprep.subr.bf16.mxu0 0
        %856 = vmatpush1.bf16.xpose.msra.mxu0 0
        %857 = vmatprep.subr.bf16.mxu0 0
        %858 = vmatpush1.bf16.xpose.msra.mxu0 0
        %859 = vmatprep.subr.bf16.mxu0 0
        %860 = vmatpush1.bf16.xpose.msra.mxu0 0
        %861 = vmatprep.subr.bf16.mxu0 0
        %862 = vmatpush1.bf16.xpose.msra.mxu0 0
        %863 = vmatprep.subr.bf16.mxu0 0
        %864 = vmatpush1.bf16.xpose.msra.mxu0 0
        %865 = vmatprep.subr.bf16.mxu0 0
        %866 = vmatpush1.bf16.xpose.msra.mxu0 0
        %867 = vmatprep.subr.bf16.mxu0 0
        %868 = vmatpush1.bf16.xpose.msra.mxu0 0
        %869 = vmatprep.subr.bf16.mxu0 0
        %870 = vmatpush1.bf16.xpose.msra.mxu0 0
        %871 = vmatprep.subr.bf16.mxu0 0
        %872 = vmatpush1.bf16.xpose.msra.mxu0 0
        %873 = vmatprep.subr.bf16.mxu0 0
        %874 = vmatpush1.bf16.xpose.msra.mxu0 0
        %875 = vmatprep.mubr.bf16.mxu0 0
        %876 = vmatmul.mubr.bf16.gmra.mrb[0].mxu0 %v838
        %v877 = vpop.f32.mrb[0].mxu0
        %v878 = vadd.f32 0.0, %v877
        %v879 = vpop.f32.mrb[0].mxu0
        %v880 = vpop.f32.mrb[0].mxu0
        %v881 = vpop.f32.mrb[0].mxu0
        %882 = vdwg.mxu0
        %883 = vrot.lane.b32.xlu0 %v603, 112
        %v884 = vpop.permute.xlu0 %883
        %885 = vrot.lane.b32.xlu0 %v603, 80
        %v886 = vpop.permute.xlu0 %885
        %v888 = vsel %vm607, %v884, 0
        %v891 = vsel %vm607, %v886, 0
        %893 = vmatprep.subr.bf16.mxu0 0
        %894 = vmatpush1.bf16.xpose.msra.mxu0 %v891
        %895 = vmatprep.subr.bf16.mxu0 0
        %896 = vmatpush1.bf16.xpose.msra.mxu0 0
        %897 = vmatprep.subr.bf16.mxu0 0
        %898 = vmatpush1.bf16.xpose.msra.mxu0 0
        %899 = vmatprep.subr.bf16.mxu0 0
        %900 = vmatpush1.bf16.xpose.msra.mxu0 0
        %901 = vmatprep.subr.bf16.mxu0 0
        %902 = vmatpush1.bf16.xpose.msra.mxu0 0
        %903 = vmatprep.subr.bf16.mxu0 0
        %904 = vmatpush1.bf16.xpose.msra.mxu0 0
        %905 = vmatprep.subr.bf16.mxu0 0
        %906 = vmatpush1.bf16.xpose.msra.mxu0 0
        %907 = vmatprep.subr.bf16.mxu0 0
        %908 = vmatpush1.bf16.xpose.msra.mxu0 0
        %909 = vmatprep.subr.bf16.mxu0 0
        %910 = vmatpush1.bf16.xpose.msra.mxu0 0
        %911 = vmatprep.subr.bf16.mxu0 0
        %912 = vmatpush1.bf16.xpose.msra.mxu0 0
        %913 = vmatprep.subr.bf16.mxu0 0
        %914 = vmatpush1.bf16.xpose.msra.mxu0 0
        %915 = vmatprep.subr.bf16.mxu0 0
        %916 = vmatpush1.bf16.xpose.msra.mxu0 0
        %917 = vmatprep.subr.bf16.mxu0 0
        %918 = vmatpush1.bf16.xpose.msra.mxu0 0
        %919 = vmatprep.subr.bf16.mxu0 0
        %920 = vmatpush1.bf16.xpose.msra.mxu0 0
        %921 = vmatprep.subr.bf16.mxu0 0
        %922 = vmatpush1.bf16.xpose.msra.mxu0 0
        %923 = vmatprep.subr.bf16.mxu0 0
        %924 = vmatpush1.bf16.xpose.msra.mxu0 0
        %925 = vmatprep.mubr.bf16.mxu0 0
        %926 = vmatmul.mubr.bf16.gmra.mrb[0].mxu0 %v888
        %v927 = vpop.f32.mrb[0].mxu0
        %v928 = vadd.f32 0.0, %v927
        %v929 = vpop.f32.mrb[0].mxu0
        %v930 = vpop.f32.mrb[0].mxu0
        %v931 = vpop.f32.mrb[0].mxu0
        %932 = vdwg.mxu0
        %v933 = vmul.f32 %v878, 0.25
        %v934 = vmul.f32 %v928, 0.25
        %v935 = vsel %vm706, %v933, -inf
        %v936 = vsel %vm706, %v934, -inf
        %v937 = vsel %vm709, %v935, -inf
        %938 = vmax.xlane.f32.xlu0 %v937
        %v939 = vpop.xlane.xlu0 %938
        %v940 = vsel %vm709, %v936, -inf
        %941 = vmax.xlane.f32.xlu0 %v940
        %v942 = vpop.xlane.xlu0 %941
        %v943 = vsub.f32 %v935, %v939
        %v944 = vsub.f32 %v936, %v942
        %v945 = vmul.f32 %v943, 1.442695
        %v946 = vpow.pop %v945
        %v947 = vmul.f32 %v944, 1.442695
        %v948 = vpow.pop %v947
        %v949 = vsel %vm709, %v946, 0.0
        %950 = vadd.xlane.f32.xlu0 %v949
        %v951 = vpop.xlane.xlu0 %950
        %v952 = vsel %vm709, %v948, 0.0
        %953 = vadd.xlane.f32.xlu0 %v952
        %v954 = vpop.xlane.xlu0 %953
        %v955 = vrcp.pop %v951
        %v956 = vrcp.pop %v954
        %v957 = vmul.f32 %v946, %v955
        %v958 = vmul.f32 %v948, %v956
        %s959 = scalar_lea.vmem %s450, 16 [#allocation9]
        %960 = vst.msk [vmem:[%s959] sm:$0xff] %vm709, %v957
        %961 = vst.msk [vmem:[%s959 + $0x8] sm:$0xff] %vm709, %v958
        %v962 = vpack.c.bf16 %v957, %v957
        %v963 = vpack.c.bf16 %v958, %v958
        %964 = vrot.lane.b32.xlu0 %v602, 48
        %v965 = vpop.permute.xlu0 %964
        %v967 = vsel %vm709, %v962, 0
        %v970 = vsel %vm741, %v965, 0
        %972 = vmatprep.subr.bf16.mxu0 0
        %973 = vmatpush1.bf16.msra.mxu0 %v970
        %974 = vmatprep.subr.bf16.mxu0 0
        %975 = vmatpush1.bf16.msra.mxu0 0
        %976 = vmatprep.subr.bf16.mxu0 0
        %977 = vmatpush1.bf16.msra.mxu0 0
        %978 = vmatprep.subr.bf16.mxu0 0
        %979 = vmatpush1.bf16.msra.mxu0 0
        %980 = vmatprep.subr.bf16.mxu0 0
        %981 = vmatpush1.bf16.msra.mxu0 0
        %982 = vmatprep.subr.bf16.mxu0 0
        %983 = vmatpush1.bf16.msra.mxu0 0
        %984 = vmatprep.subr.bf16.mxu0 0
        %985 = vmatpush1.bf16.msra.mxu0 0
        %986 = vmatprep.subr.bf16.mxu0 0
        %987 = vmatpush1.bf16.msra.mxu0 0
        %988 = vmatprep.subr.bf16.mxu0 0
        %989 = vmatpush1.bf16.msra.mxu0 0
        %990 = vmatprep.subr.bf16.mxu0 0
        %991 = vmatpush1.bf16.msra.mxu0 0
        %992 = vmatprep.subr.bf16.mxu0 0
        %993 = vmatpush1.bf16.msra.mxu0 0
        %994 = vmatprep.subr.bf16.mxu0 0
        %995 = vmatpush1.bf16.msra.mxu0 0
        %996 = vmatprep.subr.bf16.mxu0 0
        %997 = vmatpush1.bf16.msra.mxu0 0
        %998 = vmatprep.subr.bf16.mxu0 0
        %999 = vmatpush1.bf16.msra.mxu0 0
        %1000 = vmatprep.subr.bf16.mxu0 0
        %1001 = vmatpush1.bf16.msra.mxu0 0
        %1002 = vmatprep.subr.bf16.mxu0 0
        %1003 = vmatpush1.bf16.msra.mxu0 0
        %1004 = vmatprep.mubr.bf16.mxu0 0
        %1005 = vmatmul.mubr.bf16.gmra.mrb[0].mxu0 %v967
        %v1006 = vpop.f32.mrb[0].mxu0
        %v1007 = vadd.f32 0.0, %v1006
        %v1008 = vpop.f32.mrb[0].mxu0
        %v1009 = vpop.f32.mrb[0].mxu0
        %v1010 = vpop.f32.mrb[0].mxu0
        %1011 = vdwg.mxu0
        %1012 = vrot.lane.b32.xlu0 %v603, 48
        %v1013 = vpop.permute.xlu0 %1012
        %v1015 = vsel %vm709, %v963, 0
        %v1018 = vsel %vm741, %v1013, 0
        %1020 = vmatprep.subr.bf16.mxu0 0
        %1021 = vmatpush1.bf16.msra.mxu0 %v1018
        %1022 = vmatprep.subr.bf16.mxu0 0
        %1023 = vmatpush1.bf16.msra.mxu0 0
        %1024 = vmatprep.subr.bf16.mxu0 0
        %1025 = vmatpush1.bf16.msra.mxu0 0
        %1026 = vmatprep.subr.bf16.mxu0 0
        %1027 = vmatpush1.bf16.msra.mxu0 0
        %1028 = vmatprep.subr.bf16.mxu0 0
        %1029 = vmatpush1.bf16.msra.mxu0 0
        %1030 = vmatprep.subr.bf16.mxu0 0
        %1031 = vmatpush1.bf16.msra.mxu0 0
        %1032 = vmatprep.subr.bf16.mxu0 0
        %1033 = vmatpush1.bf16.msra.mxu0 0
        %1034 = vmatprep.subr.bf16.mxu0 0
        %1035 = vmatpush1.bf16.msra.mxu0 0
        %1036 = vmatprep.subr.bf16.mxu0 0
        %1037 = vmatpush1.bf16.msra.mxu0 0
        %1038 = vmatprep.subr.bf16.mxu0 0
        %1039 = vmatpush1.bf16.msra.mxu0 0
        %1040 = vmatprep.subr.bf16.mxu0 0
        %1041 = vmatpush1.bf16.msra.mxu0 0
        %1042 = vmatprep.subr.bf16.mxu0 0
        %1043 = vmatpush1.bf16.msra.mxu0 0
        %1044 = vmatprep.subr.bf16.mxu0 0
        %1045 = vmatpush1.bf16.msra.mxu0 0
        %1046 = vmatprep.subr.bf16.mxu0 0
        %1047 = vmatpush1.bf16.msra.mxu0 0
        %1048 = vmatprep.subr.bf16.mxu0 0
        %1049 = vmatpush1.bf16.msra.mxu0 0
        %1050 = vmatprep.subr.bf16.mxu0 0
        %1051 = vmatpush1.bf16.msra.mxu0 0
        %1052 = vmatprep.mubr.bf16.mxu0 0
        %1053 = vmatmul.mubr.bf16.gmra.mrb[0].mxu0 %v1015
        %v1054 = vpop.f32.mrb[0].mxu0
        %v1055 = vadd.f32 0.0, %v1054
        %v1056 = vpop.f32.mrb[0].mxu0
        %v1057 = vpop.f32.mrb[0].mxu0
        %v1058 = vpop.f32.mrb[0].mxu0
        %1059 = vdwg.mxu0
        %1062 = vrot.lane.b32.xlu0 %v1007, 16
        %v1063 = vpop.permute.xlu0 %1062
        %1064 = vrot.lane.b32.xlu0 %v1055, 16
        %v1065 = vpop.permute.xlu0 %1064
        %v1068 = vsel %vm607, %v780, %v1063
        %v1069 = vsel %vm607, %v828, %v1065
        %v1070 = vpack.c.bf16 %v1069, %v1068
        %v1071 = vld [vmem:[%s460] sm:$0xf]
        %v1072 = vld [vmem:[%s460 + $0x4] sm:$0xf]
        %v1073 = vld [vmem:[%s460 + $0x8] sm:$0xf]
        %v1074 = vld [vmem:[%s460 + $0xc] sm:$0xf]
        %v1075 = vlaneseq
        %v1076 = vshrl.u32 %v1075, 7
        %v1077 = vsub.s32 0, %v1076
        %v1078 = vrot.slane %v492, %v1077
        %v1083 = vunpack.c.l.b16 %v1071
        %v1084 = vunpack.c.l.b16 %v1072
        %v1085 = vunpack.c.l.b16 %v1073
        %v1086 = vunpack.c.l.b16 %v1074
        %v1087 = vpack.c.b16 %v1084, %v1083
        %v1088 = vpack.c.b16 %v1086, %v1085
        %v1092 = vsel %vm496, %v1070, 0
        %1094 = vmatprep.subr.bf16.mxu0 0
        %1095 = vmatpush1.bf16.msra.mxu0 %v1087
        %1096 = vmatprep.subr.bf16.mxu0 0
        %1097 = vmatpush1.bf16.msra.mxu0 %v1088
        %1098 = vmatprep.subr.bf16.mxu0 0
        %1099 = vmatpush1.bf16.msra.mxu0 0
        %1100 = vmatprep.subr.bf16.mxu0 0
        %1101 = vmatpush1.bf16.msra.mxu0 0
        %1102 = vmatprep.subr.bf16.mxu0 0
        %1103 = vmatpush1.bf16.msra.mxu0 0
        %1104 = vmatprep.subr.bf16.mxu0 0
        %1105 = vmatpush1.bf16.msra.mxu0 0
        %1106 = vmatprep.subr.bf16.mxu0 0
        %1107 = vmatpush1.bf16.msra.mxu0 0
        %1108 = vmatprep.subr.bf16.mxu0 0
        %1109 = vmatpush1.bf16.msra.mxu0 0
        %1110 = vmatprep.subr.bf16.mxu0 0
        %1111 = vmatpush1.bf16.msra.mxu0 0
        %1112 = vmatprep.subr.bf16.mxu0 0
        %1113 = vmatpush1.bf16.msra.mxu0 0
        %1114 = vmatprep.subr.bf16.mxu0 0
        %1115 = vmatpush1.bf16.msra.mxu0 0
        %1116 = vmatprep.subr.bf16.mxu0 0
        %1117 = vmatpush1.bf16.msra.mxu0 0
        %1118 = vmatprep.subr.bf16.mxu0 0
        %1119 = vmatpush1.bf16.msra.mxu0 0
        %1120 = vmatprep.subr.bf16.mxu0 0
        %1121 = vmatpush1.bf16.msra.mxu0 0
        %1122 = vmatprep.subr.bf16.mxu0 0
        %1123 = vmatpush1.bf16.msra.mxu0 0
        %1124 = vmatprep.subr.bf16.mxu0 0
        %1125 = vmatpush1.bf16.msra.mxu0 0
        %1126 = vmatprep.mubr.bf16.mxu0 0
        %1127 = vmatmul.mubr.bf16.gmra.mrb[0].mxu0 %v1092
        %v1128 = vpop.f32.mrb[0].mxu0
        %v1129 = vadd.f32 %v1078, %v1128
        %v1130 = vpop.f32.mrb[0].mxu0
        %v1131 = vpop.f32.mrb[0].mxu0
        %v1132 = vadd.f32 %v1078, %v1131
        %v1133 = vpop.f32.mrb[0].mxu0
        %1134 = vdwg.mxu0
        %v1135 = vadd.f32 %v534, %v1129
        %v1136 = vadd.f32 %v535, %v1132
        %v1137 = vsel %vm496, %v1135, 0.0
        %1138 = vadd.xlane.f32.xlu0 %v1137
        %v1139 = vpop.xlane.xlu0 %1138
        %v1140 = vsel %vm496, %v1136, 0.0
        %1141 = vadd.xlane.f32.xlu0 %v1140
        %v1142 = vpop.xlane.xlu0 %1141
        %v1143 = vmul.f32 %v1139, %v503
        %v1144 = vmul.f32 %v1142, %v503
        %v1145 = vsub.f32 %v1135, %v1143
        %v1146 = vsub.f32 %v1136, %v1144
        %v1147 = vmul.f32 %v1145, %v1145
        %v1148 = vmul.f32 %v1146, %v1146
        %v1149 = vsel %vm496, %v1147, 0.0
        %1150 = vadd.xlane.f32.xlu0 %v1149
        %v1151 = vpop.xlane.xlu0 %1150
        %v1152 = vsel %vm496, %v1148, 0.0
        %1153 = vadd.xlane.f32.xlu0 %v1152
        %v1154 = vpop.xlane.xlu0 %1153
        %v1155 = vmul.f32 %v1151, %v503
        %v1156 = vmul.f32 %v1154, %v503
        %v1157 = vadd.f32 %v1155, 1e-05
        %v1158 = vadd.f32 %v1156, 1e-05
        %v1159 = vrsqrt.pop %v1157
        %v1160 = vrsqrt.pop %v1158
        %v1161 = vmul.f32 %v1145, %v1159
        %v1162 = vmul.f32 %v1146, %v1160
        %v1163 = vlaneseq
        %v1164 = vshrl.u32 %v1163, 7
        %v1165 = vsub.s32 0, %v1164
        %v1166 = vrot.slane %v490, %v1165
        %v1167 = vmul.f32 %v1161, %v1166
        %v1168 = vmul.f32 %v1162, %v1166
        %v1169 = vlaneseq
        %v1170 = vshrl.u32 %v1169, 7
        %v1171 = vsub.s32 0, %v1170
        %v1172 = vrot.slane %v491, %v1171
        %v1173 = vadd.f32 %v1167, %v1172
        %v1174 = vadd.f32 %v1168, %v1172
        %v1175 = vpack.c.bf16 %v1174, %v1173
        %v1176 = vld [vmem:[%s465] sm:$0xf]
        %v1177 = vld [vmem:[%s465 + $0x4] sm:$0xf]
        %v1178 = vld [vmem:[%s465 + $0x8] sm:$0xf]
        %v1179 = vld [vmem:[%s465 + $0xc] sm:$0xf]
        %v1180 = vld [vmem:[%s477] sm:$0x1]
        %v1182 = vlaneseq
        %v1183 = vshrl.u32 %v1182, 7
        %v1184 = vsub.s32 0, %v1183
        %v1185 = vrot.slane %v1180, %v1184
        %v1191 = vunpack.c.l.b16 %v1176
        %v1192 = vunpack.c.l.b16 %v1177
        %v1193 = vunpack.c.l.b16 %v1178
        %v1194 = vunpack.c.l.b16 %v1179
        %v1195 = vpack.c.b16 %v1192, %v1191
        %v1196 = vpack.c.b16 %v1194, %v1193
        %v1200 = vsel %vm496, %v1175, 0
        %1202 = vmatprep.subr.bf16.mxu0 0
        %1203 = vmatpush1.bf16.msra.mxu0 %v1195
        %1204 = vmatprep.subr.bf16.mxu0 0
        %1205 = vmatpush1.bf16.msra.mxu0 %v1196
        %1206 = vmatprep.subr.bf16.mxu0 0
        %1207 = vmatpush1.bf16.msra.mxu0 0
        %1208 = vmatprep.subr.bf16.mxu0 0
        %1209 = vmatpush1.bf16.msra.mxu0 0
        %1210 = vmatprep.subr.bf16.mxu0 0
        %1211 = vmatpush1.bf16.msra.mxu0 0
        %1212 = vmatprep.subr.bf16.mxu0 0
        %1213 = vmatpush1.bf16.msra.mxu0 0
        %1214 = vmatprep.subr.bf16.mxu0 0
        %1215 = vmatpush1.bf16.msra.mxu0 0
        %1216 = vmatprep.subr.bf16.mxu0 0
        %1217 = vmatpush1.bf16.msra.mxu0 0
        %1218 = vmatprep.subr.bf16.mxu0 0
        %1219 = vmatpush1.bf16.msra.mxu0 0
        %1220 = vmatprep.subr.bf16.mxu0 0
        %1221 = vmatpush1.bf16.msra.mxu0 0
        %1222 = vmatprep.subr.bf16.mxu0 0
        %1223 = vmatpush1.bf16.msra.mxu0 0
        %1224 = vmatprep.subr.bf16.mxu0 0
        %1225 = vmatpush1.bf16.msra.mxu0 0
        %1226 = vmatprep.subr.bf16.mxu0 0
        %1227 = vmatpush1.bf16.msra.mxu0 0
        %1228 = vmatprep.subr.bf16.mxu0 0
        %1229 = vmatpush1.bf16.msra.mxu0 0
        %1230 = vmatprep.subr.bf16.mxu0 0
        %1231 = vmatpush1.bf16.msra.mxu0 0
        %1232 = vmatprep.subr.bf16.mxu0 0
        %1233 = vmatpush1.bf16.msra.mxu0 0
        %1234 = vmatprep.mubr.bf16.mxu0 0
        %1235 = vmatmul.mubr.bf16.gmra.mrb[0].mxu0 %v1200
        %v1236 = vpop.f32.mrb[0].mxu0
        %v1237 = vadd.f32 %v1185, %v1236
        %v1238 = vpop.f32.mrb[0].mxu0
        %v1239 = vpop.f32.mrb[0].mxu0
        %v1240 = vadd.f32 %v1185, %v1239
        %v1241 = vpop.f32.mrb[0].mxu0
        %1242 = vdwg.mxu0
        %v1243 = vmax.f32 %v1237, 0.0
        %v1244 = vmax.f32 %v1240, 0.0
        %v1245 = vpack.c.bf16 %v1244, %v1243
        %v1246 = vld [vmem:[%s470] sm:$0xf]
        %v1247 = vld [vmem:[%s470 + $0x4] sm:$0xf]
        %v1248 = vld [vmem:[%s470 + $0x8] sm:$0xf]
        %v1249 = vld [vmem:[%s470 + $0xc] sm:$0xf]
        %v1250 = vld [vmem:[%s470 + $0x10] sm:$0xf]
        %v1251 = vld [vmem:[%s470 + $0x14] sm:$0xf]
        %v1252 = vld [vmem:[%s470 + $0x18] sm:$0xf]
        %v1253 = vld [vmem:[%s470 + $0x1c] sm:$0xf]
        %v1254 = vlaneseq
        %v1255 = vshrl.u32 %v1254, 7
        %v1256 = vsub.s32 0, %v1255
        %v1257 = vrot.slane %v493, %v1256
        %v1266 = vunpack.c.l.b16 %v1246
        %v1267 = vunpack.c.l.b16 %v1247
        %v1268 = vunpack.c.l.b16 %v1248
        %v1269 = vunpack.c.l.b16 %v1249
        %v1270 = vunpack.c.l.b16 %v1250
        %v1271 = vunpack.c.l.b16 %v1251
        %v1272 = vunpack.c.l.b16 %v1252
        %v1273 = vunpack.c.l.b16 %v1253
        %v1274 = vpack.c.b16 %v1267, %v1266
        %v1275 = vpack.c.b16 %v1269, %v1268
        %v1276 = vpack.c.b16 %v1271, %v1270
        %v1277 = vpack.c.b16 %v1273, %v1272
        %vm1282 = vcmask 523264
        %v1284 = vsel %vm1282, %v1245, 0
        %1286 = vmatprep.subr.bf16.mxu0 0
        %1287 = vmatpush1.bf16.msra.mxu0 %v1274
        %1288 = vmatprep.subr.bf16.mxu0 0
        %1289 = vmatpush1.bf16.msra.mxu0 %v1275
        %1290 = vmatprep.subr.bf16.mxu0 0
        %1291 = vmatpush1.bf16.msra.mxu0 %v1276
        %1292 = vmatprep.subr.bf16.mxu0 0
        %1293 = vmatpush1.bf16.msra.mxu0 %v1277
        %1294 = vmatprep.subr.bf16.mxu0 0
        %1295 = vmatpush1.bf16.msra.mxu0 0
        %1296 = vmatprep.subr.bf16.mxu0 0
        %1297 = vmatpush1.bf16.msra.mxu0 0
        %1298 = vmatprep.subr.bf16.mxu0 0
        %1299 = vmatpush1.bf16.msra.mxu0 0
        %1300 = vmatprep.subr.bf16.mxu0 0
        %1301 = vmatpush1.bf16.msra.mxu0 0
        %1302 = vmatprep.subr.bf16.mxu0 0
        %1303 = vmatpush1.bf16.msra.mxu0 0
        %1304 = vmatprep.subr.bf16.mxu0 0
        %1305 = vmatpush1.bf16.msra.mxu0 0
        %1306 = vmatprep.subr.bf16.mxu0 0
        %1307 = vmatpush1.bf16.msra.mxu0 0
        %1308 = vmatprep.subr.bf16.mxu0 0
        %1309 = vmatpush1.bf16.msra.mxu0 0
        %1310 = vmatprep.subr.bf16.mxu0 0
        %1311 = vmatpush1.bf16.msra.mxu0 0
        %1312 = vmatprep.subr.bf16.mxu0 0
        %1313 = vmatpush1.bf16.msra.mxu0 0
        %1314 = vmatprep.subr.bf16.mxu0 0
        %1315 = vmatpush1.bf16.msra.mxu0 0
        %1316 = vmatprep.subr.bf16.mxu0 0
        %1317 = vmatpush1.bf16.msra.mxu0 0
        %1318 = vmatprep.mubr.bf16.mxu0 0
        %1319 = vmatmul.mubr.bf16.gmra.mrb[0].mxu0 %v1284
        %v1320 = vpop.f32.mrb[0].mxu0
        %v1321 = vadd.f32 %v1257, %v1320
        %v1322 = vpop.f32.mrb[0].mxu0
        %v1323 = vpop.f32.mrb[0].mxu0
        %v1324 = vadd.f32 %v1257, %v1323
        %v1325 = vpop.f32.mrb[0].mxu0
        %1326 = vdwg.mxu0
        %v1327 = vadd.f32 %v1173, %v1321
        %v1328 = vadd.f32 %v1174, %v1324
        %1329 = vst.msk [vmem:[#allocation2] sm:$0xff] %vm496, %v1327
        %1330 = vst.msk [vmem:[#allocation2 + $0x8] sm:$0xff] %vm496, %v1328
        %p1331 = scmp.eq.s32.totalorder %s28, 1
        // Predicated region
        $region69: #{tpu_custom_call.1} parent=55 // pred_check
          %p1332 = pneg %p1331
        $region70: #{tpu_custom_call.1} parent=55 // pred_check_branch
          %1334 = sbr.rel (%p1332) target = $region72
        $region71: #{tpu_custom_call.1} parent=55 // pred_region
          %v1335 = vpack.c.bf16 %v1328, %v1327
          %v1336 = vld [vmem:[#allocation6] sm:$0xf]
          %v1337 = vld [vmem:[#allocation6 + $0x4] sm:$0xf]
          %v1338 = vld [vmem:[#allocation6 + $0x8] sm:$0xf]
          %v1339 = vld [vmem:[#allocation6 + $0xc] sm:$0xf]
          %v1340 = vld [vmem:[%s8] sm:$0x1]
          %v1342 = vlaneseq
          %v1343 = vshrl.u32 %v1342, 7
          %v1344 = vsub.s32 0, %v1343
          %v1345 = vrot.slane %v1340, %v1344
          %v1351 = vunpack.c.l.b16 %v1336
          %v1352 = vunpack.c.l.b16 %v1337
          %v1353 = vunpack.c.l.b16 %v1338
          %v1354 = vunpack.c.l.b16 %v1339
          %v1355 = vpack.c.b16 %v1352, %v1351
          %v1356 = vpack.c.b16 %v1354, %v1353
          %v1360 = vsel %vm496, %v1335, 0
          %1362 = vmatprep.subr.bf16.mxu0 0
          %1363 = vmatpush1.bf16.msra.mxu0 %v1355
          %1364 = vmatprep.subr.bf16.mxu0 0
          %1365 = vmatpush1.bf16.msra.mxu0 %v1356
          %1366 = vmatprep.subr.bf16.mxu0 0
          %1367 = vmatpush1.bf16.msra.mxu0 0
          %1368 = vmatprep.subr.bf16.mxu0 0
          %1369 = vmatpush1.bf16.msra.mxu0 0
          %1370 = vmatprep.subr.bf16.mxu0 0
          %1371 = vmatpush1.bf16.msra.mxu0 0
          %1372 = vmatprep.subr.bf16.mxu0 0
          %1373 = vmatpush1.bf16.msra.mxu0 0
          %1374 = vmatprep.subr.bf16.mxu0 0
          %1375 = vmatpush1.bf16.msra.mxu0 0
          %1376 = vmatprep.subr.bf16.mxu0 0
          %1377 = vmatpush1.bf16.msra.mxu0 0
          %1378 = vmatprep.subr.bf16.mxu0 0
          %1379 = vmatpush1.bf16.msra.mxu0 0
          %1380 = vmatprep.subr.bf16.mxu0 0
          %1381 = vmatpush1.bf16.msra.mxu0 0
          %1382 = vmatprep.subr.bf16.mxu0 0
          %1383 = vmatpush1.bf16.msra.mxu0 0
          %1384 = vmatprep.subr.bf16.mxu0 0
          %1385 = vmatpush1.bf16.msra.mxu0 0
          %1386 = vmatprep.subr.bf16.mxu0 0
          %1387 = vmatpush1.bf16.msra.mxu0 0
          %1388 = vmatprep.subr.bf16.mxu0 0
          %1389 = vmatpush1.bf16.msra.mxu0 0
          %1390 = vmatprep.subr.bf16.mxu0 0
          %1391 = vmatpush1.bf16.msra.mxu0 0
          %1392 = vmatprep.subr.bf16.mxu0 0
          %1393 = vmatpush1.bf16.msra.mxu0 0
          %1394 = vmatprep.mubr.bf16.mxu0 0
          %1395 = vmatmul.mubr.bf16.gmra.mrb[0].mxu0 %v1360
          %v1396 = vpop.f32.mrb[0].mxu0
          %v1397 = vadd.f32 %v1345, %v1396
          %v1398 = vpop.f32.mrb[0].mxu0
          %v1399 = vpop.f32.mrb[0].mxu0
          %v1400 = vadd.f32 %v1345, %v1399
          %v1401 = vpop.f32.mrb[0].mxu0
          %1402 = vdwg.mxu0
          %vm1403 = vcmask 408576
          %1404 = vst.msk [vmem:[#allocation8] sm:$0xff] %vm1403, %v1397
          %1405 = vst.msk [vmem:[#allocation8 + $0x8] sm:$0xff] %vm1403, %v1400
        $region72: #{tpu_custom_call.1} parent=55 // pred_fallthru
          _
        %s1406 = sand.u32 %s276, 1
        %s1407 = scalar_lea.sflag [#allocation10], %s1406
        %s1408 = sand.u32 %s276, 1
        %s1409 = smul.addr %s1408, 32
        %s1410 = scalar_lea.vmem [#allocation9], %s1409
        // Predicated region
        $region73: #{tpu_custom_call.1} parent=55 // pred_check
          %p1411 = pneg %p260
        $region74: #{tpu_custom_call.1} parent=55 // pred_check_branch
          %1413 = sbr.rel (%p1411) target = $region76
        $region75: #{tpu_custom_call.1} parent=55 // pred_region
          %s1415 = ssub.s32 256, 256
          %1416 = vsyncadd [#allocation5], %s1415
          %s1417 = sshll.u32 [#allocation8], 4
          %s1418 = int_to_ptr.vmem [resolvable:$true] %s1417
          %1423 = dma.vmem_to_hbm [thread:$0]  %s1418, 256, %s9, [#allocation5], 128, 128, 8
        $region76: #{tpu_custom_call.1} parent=55 // pred_fallthru
          _
        // Predicated region
        $region77: #{tpu_custom_call.1} parent=55 // pred_check
          %p1424 = pneg %p286
        $region78: #{tpu_custom_call.1} parent=55 // pred_check_branch
          %1426 = sbr.rel (%p1424) target = $region80
        $region79: #{tpu_custom_call.1} parent=55 // pred_region
          %s1428 = ssub.s32 512, 512
          %1429 = vsyncadd %s1407, %s1428
          %s1430 = smul.addr %s28, 4
          %s1431 = smul.addr %s1430, 128
          %s1432 = scalar_lea.hbm %s10, %s1431
          %s1433 = sshll.u32 %s1410, 4
          %s1434 = int_to_ptr.vmem [resolvable:$true] %s1433
          %1439 = dma.vmem_to_hbm [thread:$0]  %s1434, 512, %s1432, %s1407, 128, 128, 8
        $region80: #{tpu_custom_call.1} parent=55 // pred_fallthru
          _
        // Predicated region
        $region81: #{tpu_custom_call.1} parent=55 // pred_check
          %p1440 = pneg %p260
        $region82: #{tpu_custom_call.1} parent=55 // pred_check_branch
          %1442 = sbr.rel (%p1440) target = $region84
        $region83: #{tpu_custom_call.1} parent=55 // pred_region
          %1443 = dma.done [#allocation5], 256
        $region84: #{tpu_custom_call.1} parent=55 // pred_fallthru
          _
      $region56: #{tpu_custom_call.1} parent=5 // pred_fallthru
        _
      %p1444 = scmp.le.s32.totalorder 2, %s23
      // Predicated region
      $region85: #{tpu_custom_call.1} parent=5 // pred_check
        %p1445 = pneg %p1444
      $region86: #{tpu_custom_call.1} parent=5 // pred_check_branch
        %1447 = sbr.rel (%p1445) target = $region88
      $region87: #{tpu_custom_call.1} parent=5 // pred_region
        %s1448 = ssub.s32 %s23, 2
        // Predicated region
        $region89: #{tpu_custom_call.1} parent=87 // pred_check
          %p1449 = pneg %p292
        $region90: #{tpu_custom_call.1} parent=87 // pred_check_branch
          %1451 = sbr.rel (%p1449) target = $region92
        $region91: #{tpu_custom_call.1} parent=87 // pred_region
          %s1452 = sand.u32 %s277, 1
          %s1453 = scalar_lea.sflag [#allocation10], %s1452
          %s1454 = sand.u32 %s277, 1
          %s1455 = smul.addr %s1454, 32
          %s1456 = scalar_lea.vmem [#allocation9], %s1455
          %1457 = dma.done %s1453, 512
        $region92: #{tpu_custom_call.1} parent=87 // pred_fallthru
          _
      $region88: #{tpu_custom_call.1} parent=5 // pred_fallthru
        _
    $region6: #{tpu_custom_call.1} parent=1 // loop_footer
      %s27 = sadd.s32 1, %s23
    $region7: #{tpu_custom_call.1} parent=1 // loop_footer_branch
      %22 = sbr.rel target = $region3
    $region8: #{tpu_custom_call.1} parent=1 // loop_exit
      _
    %1458 = vsyncpa [#allocation4], 1
    %s1459 = scalar_lea.sflag [#allocation4], 1
    %1460 = vsyncpa %s1459, 1
    %1461 = vsyncpa [#allocation7], 1
    %1462 = vsyncpa [#allocation5], 1
    %s1463 = scalar_lea.sflag [#allocation5], 1
    %1464 = vsyncpa %s1463, 1
    %1465 = vsyncpa [#allocation10], 1
    %s1466 = scalar_lea.sflag [#allocation10], 1
    %1467 = vsyncpa %s1466, 1

</llo_original>
